<compile_context>
chip_gen: v7x
topology: tpu7x:2x2x1
jax: 0.10.0
libtpu: 0.0.40
codegen_flags: <defaults>
</compile_context>

<pallas_src>
import jax
import jax.numpy as jnp
import numpy as np
from jax.experimental import pallas as pl
from jax.experimental.pallas import tpu as pltpu


def make_transition_kernel(B, C_in, C_out, H, W):
    Ho, Wo = H // 2, W // 2
    two_w = 2 * W

    def kernel(x_ref, scale_ref, bias_ref, w_ref, qh_ref, o_ref, p_ref):
        # x_ref:     (B, C_in, H*W)    NCHW batch block, spatial flattened on lanes
        # scale_ref: (C_in, 1)         folded BN scale = gamma / sqrt(var + eps)
        # bias_ref:  (C_in, 1)         folded BN bias  = beta - mean * scale
        # w_ref:     (C_out, C_in)     1x1 conv weight
        # qh_ref:    (W, Wo)           horizontal pool matrix (0.25 where w//2 == wo)
        # o_ref:     (B, C_out, Ho*Wo) output block (reshapes to NCHW for free)
        # p_ref:     (C_in, Ho*Wo)     VMEM scratch: pooled activations of one image
        scale = scale_ref[...]            # hoisted: loaded/broadcast once per grid step
        bias = bias_ref[...]
        w = w_ref[...]
        qh = qh_ref[...]
        for b in range(B):                # static unroll over the batch block
            # BN + ReLU on the full lane-dense (C_in, H*W) tile (pure VPU work)
            y = jnp.maximum(x_ref[b] * scale + bias, 0.0)
            # 2x2 average pool (done BEFORE the linear 1x1 conv; they commute):
            #   rows 2*ho and 2*ho+1 are adjacent 2W-lane slices of the flat row.
            for ho in range(Ho):          # static unroll over pooled rows
                rows = y[:, ho * two_w:(ho + 1) * two_w]        # (C_in, 2W)
                vsum = rows[:, :W] + rows[:, W:]                # vertical pair sum
                p_ref[:, ho * Wo:(ho + 1) * Wo] = jnp.dot(
                    vsum, qh, preferred_element_type=jnp.float32)  # horiz pairs * 0.25
            # 1x1 conv as one lane-dense matmul: (C_out, C_in) @ (C_in, Ho*Wo)
            o_ref[b] = jnp.dot(
                w, p_ref[...], preferred_element_type=jnp.float32).astype(o_ref.dtype)

    return kernel


def transition_forward(x_nchw, gamma, beta, conv_w, eps=1e-5):
    """x_nchw: (N, C_in, H, W); conv_w: (C_out, C_in, 1, 1). Returns NCHW output."""
    N, C_in, H, W = x_nchw.shape
    C_out = conv_w.shape[0]
    Ho, Wo = H // 2, W // 2

    # ---- glue: training-mode BN batch stats folded to per-channel scale/bias ----
    # (cross-batch reduction; kept outside the tiled kernel by construction)
    mean = jnp.mean(x_nchw, axis=(0, 2, 3))
    var = jnp.mean(jnp.square(x_nchw - mean[None, :, None, None]), axis=(0, 2, 3))
    scale = gamma / jnp.sqrt(var + eps)
    bias = beta - mean * scale

    # Free (contiguous) reshapes only -- no HBM transposes.
    x_flat = x_nchw.reshape(N, C_in, H * W)
    w_mat = conv_w[:, :, 0, 0].astype(jnp.float32)          # (C_out, C_in)

    # Tiny horizontal-pool matrix: (W, Wo), 0.25 where w // 2 == wo
    # (0.25 is the full 2x2 averaging factor; odd trailing col/row is dropped,
    #  matching F.avg_pool2d semantics).
    w_ids = jnp.arange(W)
    wo_ids = jnp.arange(Wo)
    qh = ((w_ids[:, None] // 2) == wo_ids[None, :]).astype(jnp.float32) * 0.25

    # Batch block: largest divisor of N whose input block stays <= ~4 MiB.
    bytes_per_img = C_in * H * W * x_nchw.dtype.itemsize
    B = 1
    for cand in range(1, N + 1):
        if N % cand == 0 and cand * bytes_per_img <= 4 * 1024 * 1024:
            B = cand
    grid = (N // B,)

    kernel = make_transition_kernel(B, C_in, C_out, H, W)

    out_flat = pl.pallas_call(
        kernel,
        out_shape=jax.ShapeDtypeStruct((N, C_out, Ho * Wo), x_nchw.dtype),
        grid_spec=pltpu.PrefetchScalarGridSpec(
            num_scalar_prefetch=0,
            grid=grid,
            in_specs=[
                pl.BlockSpec((B, C_in, H * W), lambda i: (i, 0, 0)),
                pl.BlockSpec((C_in, 1), lambda i: (0, 0)),
                pl.BlockSpec((C_in, 1), lambda i: (0, 0)),
                pl.BlockSpec((C_out, C_in), lambda i: (0, 0)),
                pl.BlockSpec((W, Wo), lambda i: (0, 0)),
            ],
            out_specs=pl.BlockSpec((B, C_out, Ho * Wo), lambda i: (i, 0, 0)),
            scratch_shapes=[pltpu.VMEM((C_in, Ho * Wo), jnp.float32)],
        ),
        compiler_params=pltpu.CompilerParams(
            dimension_semantics=("parallel",)),
    )(x_flat, scale.reshape(C_in, 1), bias.reshape(C_in, 1), w_mat, qh)

    # Free reshape back to NCHW -- no transpose needed.
    return out_flat.reshape(N, C_out, Ho, Wo)


def transition_reference(x_nchw, gamma, beta, conv_w, eps=1e-5):
    """Pure-JAX reference mirroring the PyTorch forward (training-mode BN)."""
    mean = jnp.mean(x_nchw, axis=(0, 2, 3), keepdims=True)
    var = jnp.mean((x_nchw - mean) ** 2, axis=(0, 2, 3), keepdims=True)
    xn = (x_nchw - mean) / jnp.sqrt(var + eps)
    xn = xn * gamma[None, :, None, None] + beta[None, :, None, None]
    y = jnp.maximum(xn, 0.0)
    z = jnp.einsum('nchw,oc->nohw', y, conv_w[:, :, 0, 0])
    N, O, H, W = z.shape
    return z.reshape(N, O, H // 2, 2, W // 2, 2).mean(axis=(3, 5))


if __name__ == "__main__":
    in_planes, out_planes = 4, 8
    N, H, W = 2, 16, 16

    key = jax.random.PRNGKey(0)
    kx, kg, kb, kw = jax.random.split(key, 4)

    x = jax.random.normal(kx, (N, in_planes, H, W), dtype=jnp.float32)
    # deterministic synthetic parameters (BatchNorm2d affine + Conv2d 1x1 weight)
    gamma = 1.0 + 0.1 * jax.random.normal(kg, (in_planes,), dtype=jnp.float32)
    beta = 0.1 * jax.random.normal(kb, (in_planes,), dtype=jnp.float32)
    conv_w = 0.2 * jax.random.normal(kw, (out_planes, in_planes, 1, 1),
                                     dtype=jnp.float32)

    out = transition_forward(x, gamma, beta, conv_w)
    out = jax.block_until_ready(out)

    ref = transition_reference(x, gamma, beta, conv_w)
    assert out.shape == (N, out_planes, H // 2, W // 2), out.shape
    np.testing.assert_allclose(np.asarray(out), np.asarray(ref),
                               rtol=1e-4, atol=1e-4)
    print("KERNEL_OK")
</pallas_src>

<mosaic_0001>
module attributes {stable_mosaic.version = 11 : i64} {
  func.func @kernel(%arg0: i32, %arg1: memref<2x4x256xf32, #tpu.memory_space<vmem>>, %arg2: memref<4x1xf32, #tpu.memory_space<vmem>>, %arg3: memref<4x1xf32, #tpu.memory_space<vmem>>, %arg4: memref<8x4xf32, #tpu.memory_space<vmem>>, %arg5: memref<16x8xf32, #tpu.memory_space<vmem>>, %arg6: memref<2x8x64xf32, #tpu.memory_space<vmem>>, %arg7: memref<4x64xf32, #tpu.memory_space<vmem>>) attributes {dimension_semantics = [#tpu.dimension_semantics<parallel>], iteration_bounds = array<i64: 1>, scalar_prefetch = 0 : i64, scratch_operands = 1 : i64, tpu.core_type = #tpu.core_type<tc>, window_params = [{transform_indices = @transform_0, window_bounds = array<i64: 2, 4, 256>}, {pipeline_mode = #tpu.pipeline_mode<synchronous>, transform_indices = @transform_1, window_bounds = array<i64: 4, 1>}, {pipeline_mode = #tpu.pipeline_mode<synchronous>, transform_indices = @transform_2, window_bounds = array<i64: 4, 1>}, {pipeline_mode = #tpu.pipeline_mode<synchronous>, transform_indices = @transform_3, window_bounds = array<i64: 8, 4>}, {pipeline_mode = #tpu.pipeline_mode<synchronous>, transform_indices = @transform_4, window_bounds = array<i64: 16, 8>}, {transform_indices = @transform_5, window_bounds = array<i64: 2, 8, 64>}]} {
    %c0 = arith.constant 0 : index
    %c0_0 = arith.constant 0 : index
    %0 = vector.load %arg2[%c0, %c0_0] : memref<4x1xf32, #tpu.memory_space<vmem>>, vector<4x1xf32>
    %c0_1 = arith.constant 0 : index
    %c0_2 = arith.constant 0 : index
    %1 = vector.load %arg3[%c0_1, %c0_2] : memref<4x1xf32, #tpu.memory_space<vmem>>, vector<4x1xf32>
    %c0_3 = arith.constant 0 : index
    %c0_4 = arith.constant 0 : index
    %2 = vector.load %arg4[%c0_3, %c0_4] : memref<8x4xf32, #tpu.memory_space<vmem>>, vector<8x4xf32>
    %c0_5 = arith.constant 0 : index
    %c0_6 = arith.constant 0 : index
    %3 = vector.load %arg5[%c0_5, %c0_6] : memref<16x8xf32, #tpu.memory_space<vmem>>, vector<16x8xf32>
    %c0_7 = arith.constant 0 : index
    %c0_8 = arith.constant 0 : index
    %c0_9 = arith.constant 0 : index
    %4 = vector.load %arg1[%c0_7, %c0_8, %c0_9] : memref<2x4x256xf32, #tpu.memory_space<vmem>>, vector<1x4x256xf32>
    %5 = vector.shape_cast %4 : vector<1x4x256xf32> to vector<4x256xf32>
    %6 = vector.broadcast %0 : vector<4x1xf32> to vector<4x256xf32>
    %7 = arith.mulf %5, %6 : vector<4x256xf32>
    %8 = vector.broadcast %1 : vector<4x1xf32> to vector<4x256xf32>
    %9 = arith.addf %7, %8 : vector<4x256xf32>
    %cst = arith.constant 0.000000e+00 : f32
    %10 = vector.broadcast %cst : f32 to vector<4x256xf32>
    %11 = arith.maximumf %9, %10 : vector<4x256xf32>
    %12 = vector.extract_strided_slice %11 {offsets = [0, 0], sizes = [4, 32], strides = [1, 1]} : vector<4x256xf32> to vector<4x32xf32>
    %13 = vector.extract_strided_slice %12 {offsets = [0, 0], sizes = [4, 16], strides = [1, 1]} : vector<4x32xf32> to vector<4x16xf32>
    %14 = vector.extract_strided_slice %12 {offsets = [0, 16], sizes = [4, 16], strides = [1, 1]} : vector<4x32xf32> to vector<4x16xf32>
    %15 = arith.addf %13, %14 : vector<4x16xf32>
    %cst_10 = arith.constant dense<0.000000e+00> : vector<4x8xf32>
    %16 = tpu.matmul %15, %3, %cst_10 {dimension_numbers = #tpu.dot_dimension_numbers<[1], [0], [0], [1], [0, 0, 1, 1], [], []>} : vector<4x16xf32>, vector<16x8xf32>, vector<4x8xf32> -> vector<4x8xf32>
    %c0_11 = arith.constant 0 : index
    %c0_12 = arith.constant 0 : index
    %17 = vector.load %arg7[%c0_11, %c0_12] : memref<4x64xf32, #tpu.memory_space<vmem>>, vector<4x8xf32>
    tpu.vector_store %arg7[%c0_11, %c0_12], %16 {strides = array<i32>} : memref<4x64xf32, #tpu.memory_space<vmem>>, vector<4x8xf32>,
    %18 = vector.extract_strided_slice %11 {offsets = [0, 32], sizes = [4, 32], strides = [1, 1]} : vector<4x256xf32> to vector<4x32xf32>
    %19 = vector.extract_strided_slice %18 {offsets = [0, 0], sizes = [4, 16], strides = [1, 1]} : vector<4x32xf32> to vector<4x16xf32>
    %20 = vector.extract_strided_slice %18 {offsets = [0, 16], sizes = [4, 16], strides = [1, 1]} : vector<4x32xf32> to vector<4x16xf32>
    %21 = arith.addf %19, %20 : vector<4x16xf32>
    %cst_13 = arith.constant dense<0.000000e+00> : vector<4x8xf32>
    %22 = tpu.matmul %21, %3, %cst_13 {dimension_numbers = #tpu.dot_dimension_numbers<[1], [0], [0], [1], [0, 0, 1, 1], [], []>} : vector<4x16xf32>, vector<16x8xf32>, vector<4x8xf32> -> vector<4x8xf32>
    %c0_14 = arith.constant 0 : index
    %c8 = arith.constant 8 : index
    %23 = vector.load %arg7[%c0_14, %c8] : memref<4x64xf32, #tpu.memory_space<vmem>>, vector<4x8xf32>
    tpu.vector_store %arg7[%c0_14, %c8], %22 {strides = array<i32>} : memref<4x64xf32, #tpu.memory_space<vmem>>, vector<4x8xf32>,
    %24 = vector.extract_strided_slice %11 {offsets = [0, 64], sizes = [4, 32], strides = [1, 1]} : vector<4x256xf32> to vector<4x32xf32>
    %25 = vector.extract_strided_slice %24 {offsets = [0, 0], sizes = [4, 16], strides = [1, 1]} : vector<4x32xf32> to vector<4x16xf32>
    %26 = vector.extract_strided_slice %24 {offsets = [0, 16], sizes = [4, 16], strides = [1, 1]} : vector<4x32xf32> to vector<4x16xf32>
    %27 = arith.addf %25, %26 : vector<4x16xf32>
    %cst_15 = arith.constant dense<0.000000e+00> : vector<4x8xf32>
    %28 = tpu.matmul %27, %3, %cst_15 {dimension_numbers = #tpu.dot_dimension_numbers<[1], [0], [0], [1], [0, 0, 1, 1], [], []>} : vector<4x16xf32>, vector<16x8xf32>, vector<4x8xf32> -> vector<4x8xf32>
    %c0_16 = arith.constant 0 : index
    %c16 = arith.constant 16 : index
    %29 = vector.load %arg7[%c0_16, %c16] : memref<4x64xf32, #tpu.memory_space<vmem>>, vector<4x8xf32>
    tpu.vector_store %arg7[%c0_16, %c16], %28 {strides = array<i32>} : memref<4x64xf32, #tpu.memory_space<vmem>>, vector<4x8xf32>,
    %30 = vector.extract_strided_slice %11 {offsets = [0, 96], sizes = [4, 32], strides = [1, 1]} : vector<4x256xf32> to vector<4x32xf32>
    %31 = vector.extract_strided_slice %30 {offsets = [0, 0], sizes = [4, 16], strides = [1, 1]} : vector<4x32xf32> to vector<4x16xf32>
    %32 = vector.extract_strided_slice %30 {offsets = [0, 16], sizes = [4, 16], strides = [1, 1]} : vector<4x32xf32> to vector<4x16xf32>
    %33 = arith.addf %31, %32 : vector<4x16xf32>
    %cst_17 = arith.constant dense<0.000000e+00> : vector<4x8xf32>
    %34 = tpu.matmul %33, %3, %cst_17 {dimension_numbers = #tpu.dot_dimension_numbers<[1], [0], [0], [1], [0, 0, 1, 1], [], []>} : vector<4x16xf32>, vector<16x8xf32>, vector<4x8xf32> -> vector<4x8xf32>
    %c0_18 = arith.constant 0 : index
    %c24 = arith.constant 24 : index
    %35 = vector.load %arg7[%c0_18, %c24] : memref<4x64xf32, #tpu.memory_space<vmem>>, vector<4x8xf32>
    tpu.vector_store %arg7[%c0_18, %c24], %34 {strides = array<i32>} : memref<4x64xf32, #tpu.memory_space<vmem>>, vector<4x8xf32>,
    %36 = vector.extract_strided_slice %11 {offsets = [0, 128], sizes = [4, 32], strides = [1, 1]} : vector<4x256xf32> to vector<4x32xf32>
    %37 = vector.extract_strided_slice %36 {offsets = [0, 0], sizes = [4, 16], strides = [1, 1]} : vector<4x32xf32> to vector<4x16xf32>
    %38 = vector.extract_strided_slice %36 {offsets = [0, 16], sizes = [4, 16], strides = [1, 1]} : vector<4x32xf32> to vector<4x16xf32>
    %39 = arith.addf %37, %38 : vector<4x16xf32>
    %cst_19 = arith.constant dense<0.000000e+00> : vector<4x8xf32>
    %40 = tpu.matmul %39, %3, %cst_19 {dimension_numbers = #tpu.dot_dimension_numbers<[1], [0], [0], [1], [0, 0, 1, 1], [], []>} : vector<4x16xf32>, vector<16x8xf32>, vector<4x8xf32> -> vector<4x8xf32>
    %c0_20 = arith.constant 0 : index
    %c32 = arith.constant 32 : index
    %41 = vector.load %arg7[%c0_20, %c32] : memref<4x64xf32, #tpu.memory_space<vmem>>, vector<4x8xf32>
    tpu.vector_store %arg7[%c0_20, %c32], %40 {strides = array<i32>} : memref<4x64xf32, #tpu.memory_space<vmem>>, vector<4x8xf32>,
    %42 = vector.extract_strided_slice %11 {offsets = [0, 160], sizes = [4, 32], strides = [1, 1]} : vector<4x256xf32> to vector<4x32xf32>
    %43 = vector.extract_strided_slice %42 {offsets = [0, 0], sizes = [4, 16], strides = [1, 1]} : vector<4x32xf32> to vector<4x16xf32>
    %44 = vector.extract_strided_slice %42 {offsets = [0, 16], sizes = [4, 16], strides = [1, 1]} : vector<4x32xf32> to vector<4x16xf32>
    %45 = arith.addf %43, %44 : vector<4x16xf32>
    %cst_21 = arith.constant dense<0.000000e+00> : vector<4x8xf32>
    %46 = tpu.matmul %45, %3, %cst_21 {dimension_numbers = #tpu.dot_dimension_numbers<[1], [0], [0], [1], [0, 0, 1, 1], [], []>} : vector<4x16xf32>, vector<16x8xf32>, vector<4x8xf32> -> vector<4x8xf32>
    %c0_22 = arith.constant 0 : index
    %c40 = arith.constant 40 : index
    %47 = vector.load %arg7[%c0_22, %c40] : memref<4x64xf32, #tpu.memory_space<vmem>>, vector<4x8xf32>
    tpu.vector_store %arg7[%c0_22, %c40], %46 {strides = array<i32>} : memref<4x64xf32, #tpu.memory_space<vmem>>, vector<4x8xf32>,
    %48 = vector.extract_strided_slice %11 {offsets = [0, 192], sizes = [4, 32], strides = [1, 1]} : vector<4x256xf32> to vector<4x32xf32>
    %49 = vector.extract_strided_slice %48 {offsets = [0, 0], sizes = [4, 16], strides = [1, 1]} : vector<4x32xf32> to vector<4x16xf32>
    %50 = vector.extract_strided_slice %48 {offsets = [0, 16], sizes = [4, 16], strides = [1, 1]} : vector<4x32xf32> to vector<4x16xf32>
    %51 = arith.addf %49, %50 : vector<4x16xf32>
    %cst_23 = arith.constant dense<0.000000e+00> : vector<4x8xf32>
    %52 = tpu.matmul %51, %3, %cst_23 {dimension_numbers = #tpu.dot_dimension_numbers<[1], [0], [0], [1], [0, 0, 1, 1], [], []>} : vector<4x16xf32>, vector<16x8xf32>, vector<4x8xf32> -> vector<4x8xf32>
    %c0_24 = arith.constant 0 : index
    %c48 = arith.constant 48 : index
    %53 = vector.load %arg7[%c0_24, %c48] : memref<4x64xf32, #tpu.memory_space<vmem>>, vector<4x8xf32>
    tpu.vector_store %arg7[%c0_24, %c48], %52 {strides = array<i32>} : memref<4x64xf32, #tpu.memory_space<vmem>>, vector<4x8xf32>,
    %54 = vector.extract_strided_slice %11 {offsets = [0, 224], sizes = [4, 32], strides = [1, 1]} : vector<4x256xf32> to vector<4x32xf32>
    %55 = vector.extract_strided_slice %54 {offsets = [0, 0], sizes = [4, 16], strides = [1, 1]} : vector<4x32xf32> to vector<4x16xf32>
    %56 = vector.extract_strided_slice %54 {offsets = [0, 16], sizes = [4, 16], strides = [1, 1]} : vector<4x32xf32> to vector<4x16xf32>
    %57 = arith.addf %55, %56 : vector<4x16xf32>
    %cst_25 = arith.constant dense<0.000000e+00> : vector<4x8xf32>
    %58 = tpu.matmul %57, %3, %cst_25 {dimension_numbers = #tpu.dot_dimension_numbers<[1], [0], [0], [1], [0, 0, 1, 1], [], []>} : vector<4x16xf32>, vector<16x8xf32>, vector<4x8xf32> -> vector<4x8xf32>
    %c0_26 = arith.constant 0 : index
    %c56 = arith.constant 56 : index
    %59 = vector.load %arg7[%c0_26, %c56] : memref<4x64xf32, #tpu.memory_space<vmem>>, vector<4x8xf32>
    tpu.vector_store %arg7[%c0_26, %c56], %58 {strides = array<i32>} : memref<4x64xf32, #tpu.memory_space<vmem>>, vector<4x8xf32>,
    %c0_27 = arith.constant 0 : index
    %c0_28 = arith.constant 0 : index
    %60 = vector.load %arg7[%c0_27, %c0_28] : memref<4x64xf32, #tpu.memory_space<vmem>>, vector<4x64xf32>
    %cst_29 = arith.constant dense<0.000000e+00> : vector<8x64xf32>
    %61 = tpu.matmul %2, %60, %cst_29 {dimension_numbers = #tpu.dot_dimension_numbers<[1], [0], [0], [1], [0, 0, 1, 1], [], []>} : vector<8x4xf32>, vector<4x64xf32>, vector<8x64xf32> -> vector<8x64xf32>
    %c0_30 = arith.constant 0 : index
    %c0_31 = arith.constant 0 : index
    %c0_32 = arith.constant 0 : index
    %62 = vector.load %arg6[%c0_30, %c0_31, %c0_32] : memref<2x8x64xf32, #tpu.memory_space<vmem>>, vector<1x8x64xf32>
    %63 = vector.shape_cast %62 : vector<1x8x64xf32> to vector<8x64xf32>
    %64 = vector.shape_cast %61 : vector<8x64xf32> to vector<1x8x64xf32>
    tpu.vector_store %arg6[%c0_30, %c0_31, %c0_32], %64 {strides = array<i32>} : memref<2x8x64xf32, #tpu.memory_space<vmem>>, vector<1x8x64xf32>,
    %c1 = arith.constant 1 : index
    %c0_33 = arith.constant 0 : index
    %c0_34 = arith.constant 0 : index
    %65 = vector.load %arg1[%c1, %c0_33, %c0_34] : memref<2x4x256xf32, #tpu.memory_space<vmem>>, vector<1x4x256xf32>
    %66 = vector.shape_cast %65 : vector<1x4x256xf32> to vector<4x256xf32>
    %67 = vector.broadcast %0 : vector<4x1xf32> to vector<4x256xf32>
    %68 = arith.mulf %66, %67 : vector<4x256xf32>
    %69 = vector.broadcast %1 : vector<4x1xf32> to vector<4x256xf32>
    %70 = arith.addf %68, %69 : vector<4x256xf32>
    %cst_35 = arith.constant 0.000000e+00 : f32
    %71 = vector.broadcast %cst_35 : f32 to vector<4x256xf32>
    %72 = arith.maximumf %70, %71 : vector<4x256xf32>
    %73 = vector.extract_strided_slice %72 {offsets = [0, 0], sizes = [4, 32], strides = [1, 1]} : vector<4x256xf32> to vector<4x32xf32>
    %74 = vector.extract_strided_slice %73 {offsets = [0, 0], sizes = [4, 16], strides = [1, 1]} : vector<4x32xf32> to vector<4x16xf32>
    %75 = vector.extract_strided_slice %73 {offsets = [0, 16], sizes = [4, 16], strides = [1, 1]} : vector<4x32xf32> to vector<4x16xf32>
    %76 = arith.addf %74, %75 : vector<4x16xf32>
    %cst_36 = arith.constant dense<0.000000e+00> : vector<4x8xf32>
    %77 = tpu.matmul %76, %3, %cst_36 {dimension_numbers = #tpu.dot_dimension_numbers<[1], [0], [0], [1], [0, 0, 1, 1], [], []>} : vector<4x16xf32>, vector<16x8xf32>, vector<4x8xf32> -> vector<4x8xf32>
    %c0_37 = arith.constant 0 : index
    %c0_38 = arith.constant 0 : index
    %78 = vector.load %arg7[%c0_37, %c0_38] : memref<4x64xf32, #tpu.memory_space<vmem>>, vector<4x8xf32>
    tpu.vector_store %arg7[%c0_37, %c0_38], %77 {strides = array<i32>} : memref<4x64xf32, #tpu.memory_space<vmem>>, vector<4x8xf32>,
    %79 = vector.extract_strided_slice %72 {offsets = [0, 32], sizes = [4, 32], strides = [1, 1]} : vector<4x256xf32> to vector<4x32xf32>
    %80 = vector.extract_strided_slice %79 {offsets = [0, 0], sizes = [4, 16], strides = [1, 1]} : vector<4x32xf32> to vector<4x16xf32>
    %81 = vector.extract_strided_slice %79 {offsets = [0, 16], sizes = [4, 16], strides = [1, 1]} : vector<4x32xf32> to vector<4x16xf32>
    %82 = arith.addf %80, %81 : vector<4x16xf32>
    %cst_39 = arith.constant dense<0.000000e+00> : vector<4x8xf32>
    %83 = tpu.matmul %82, %3, %cst_39 {dimension_numbers = #tpu.dot_dimension_numbers<[1], [0], [0], [1], [0, 0, 1, 1], [], []>} : vector<4x16xf32>, vector<16x8xf32>, vector<4x8xf32> -> vector<4x8xf32>
    %c0_40 = arith.constant 0 : index
    %c8_41 = arith.constant 8 : index
    %84 = vector.load %arg7[%c0_40, %c8_41] : memref<4x64xf32, #tpu.memory_space<vmem>>, vector<4x8xf32>
    tpu.vector_store %arg7[%c0_40, %c8_41], %83 {strides = array<i32>} : memref<4x64xf32, #tpu.memory_space<vmem>>, vector<4x8xf32>,
    %85 = vector.extract_strided_slice %72 {offsets = [0, 64], sizes = [4, 32], strides = [1, 1]} : vector<4x256xf32> to vector<4x32xf32>
    %86 = vector.extract_strided_slice %85 {offsets = [0, 0], sizes = [4, 16], strides = [1, 1]} : vector<4x32xf32> to vector<4x16xf32>
    %87 = vector.extract_strided_slice %85 {offsets = [0, 16], sizes = [4, 16], strides = [1, 1]} : vector<4x32xf32> to vector<4x16xf32>
    %88 = arith.addf %86, %87 : vector<4x16xf32>
    %cst_42 = arith.constant dense<0.000000e+00> : vector<4x8xf32>
    %89 = tpu.matmul %88, %3, %cst_42 {dimension_numbers = #tpu.dot_dimension_numbers<[1], [0], [0], [1], [0, 0, 1, 1], [], []>} : vector<4x16xf32>, vector<16x8xf32>, vector<4x8xf32> -> vector<4x8xf32>
    %c0_43 = arith.constant 0 : index
    %c16_44 = arith.constant 16 : index
    %90 = vector.load %arg7[%c0_43, %c16_44] : memref<4x64xf32, #tpu.memory_space<vmem>>, vector<4x8xf32>
    tpu.vector_store %arg7[%c0_43, %c16_44], %89 {strides = array<i32>} : memref<4x64xf32, #tpu.memory_space<vmem>>, vector<4x8xf32>,
    %91 = vector.extract_strided_slice %72 {offsets = [0, 96], sizes = [4, 32], strides = [1, 1]} : vector<4x256xf32> to vector<4x32xf32>
    %92 = vector.extract_strided_slice %91 {offsets = [0, 0], sizes = [4, 16], strides = [1, 1]} : vector<4x32xf32> to vector<4x16xf32>
    %93 = vector.extract_strided_slice %91 {offsets = [0, 16], sizes = [4, 16], strides = [1, 1]} : vector<4x32xf32> to vector<4x16xf32>
    %94 = arith.addf %92, %93 : vector<4x16xf32>
    %cst_45 = arith.constant dense<0.000000e+00> : vector<4x8xf32>
    %95 = tpu.matmul %94, %3, %cst_45 {dimension_numbers = #tpu.dot_dimension_numbers<[1], [0], [0], [1], [0, 0, 1, 1], [], []>} : vector<4x16xf32>, vector<16x8xf32>, vector<4x8xf32> -> vector<4x8xf32>
    %c0_46 = arith.constant 0 : index
    %c24_47 = arith.constant 24 : index
    %96 = vector.load %arg7[%c0_46, %c24_47] : memref<4x64xf32, #tpu.memory_space<vmem>>, vector<4x8xf32>
    tpu.vector_store %arg7[%c0_46, %c24_47], %95 {strides = array<i32>} : memref<4x64xf32, #tpu.memory_space<vmem>>, vector<4x8xf32>,
    %97 = vector.extract_strided_slice %72 {offsets = [0, 128], sizes = [4, 32], strides = [1, 1]} : vector<4x256xf32> to vector<4x32xf32>
    %98 = vector.extract_strided_slice %97 {offsets = [0, 0], sizes = [4, 16], strides = [1, 1]} : vector<4x32xf32> to vector<4x16xf32>
    %99 = vector.extract_strided_slice %97 {offsets = [0, 16], sizes = [4, 16], strides = [1, 1]} : vector<4x32xf32> to vector<4x16xf32>
    %100 = arith.addf %98, %99 : vector<4x16xf32>
    %cst_48 = arith.constant dense<0.000000e+00> : vector<4x8xf32>
    %101 = tpu.matmul %100, %3, %cst_48 {dimension_numbers = #tpu.dot_dimension_numbers<[1], [0], [0], [1], [0, 0, 1, 1], [], []>} : vector<4x16xf32>, vector<16x8xf32>, vector<4x8xf32> -> vector<4x8xf32>
    %c0_49 = arith.constant 0 : index
    %c32_50 = arith.constant 32 : index
    %102 = vector.load %arg7[%c0_49, %c32_50] : memref<4x64xf32, #tpu.memory_space<vmem>>, vector<4x8xf32>
    tpu.vector_store %arg7[%c0_49, %c32_50], %101 {strides = array<i32>} : memref<4x64xf32, #tpu.memory_space<vmem>>, vector<4x8xf32>,
    %103 = vector.extract_strided_slice %72 {offsets = [0, 160], sizes = [4, 32], strides = [1, 1]} : vector<4x256xf32> to vector<4x32xf32>
    %104 = vector.extract_strided_slice %103 {offsets = [0, 0], sizes = [4, 16], strides = [1, 1]} : vector<4x32xf32> to vector<4x16xf32>
    %105 = vector.extract_strided_slice %103 {offsets = [0, 16], sizes = [4, 16], strides = [1, 1]} : vector<4x32xf32> to vector<4x16xf32>
    %106 = arith.addf %104, %105 : vector<4x16xf32>
    %cst_51 = arith.constant dense<0.000000e+00> : vector<4x8xf32>
    %107 = tpu.matmul %106, %3, %cst_51 {dimension_numbers = #tpu.dot_dimension_numbers<[1], [0], [0], [1], [0, 0, 1, 1], [], []>} : vector<4x16xf32>, vector<16x8xf32>, vector<4x8xf32> -> vector<4x8xf32>
    %c0_52 = arith.constant 0 : index
    %c40_53 = arith.constant 40 : index
    %108 = vector.load %arg7[%c0_52, %c40_53] : memref<4x64xf32, #tpu.memory_space<vmem>>, vector<4x8xf32>
    tpu.vector_store %arg7[%c0_52, %c40_53], %107 {strides = array<i32>} : memref<4x64xf32, #tpu.memory_space<vmem>>, vector<4x8xf32>,
    %109 = vector.extract_strided_slice %72 {offsets = [0, 192], sizes = [4, 32], strides = [1, 1]} : vector<4x256xf32> to vector<4x32xf32>
    %110 = vector.extract_strided_slice %109 {offsets = [0, 0], sizes = [4, 16], strides = [1, 1]} : vector<4x32xf32> to vector<4x16xf32>
    %111 = vector.extract_strided_slice %109 {offsets = [0, 16], sizes = [4, 16], strides = [1, 1]} : vector<4x32xf32> to vector<4x16xf32>
    %112 = arith.addf %110, %111 : vector<4x16xf32>
    %cst_54 = arith.constant dense<0.000000e+00> : vector<4x8xf32>
    %113 = tpu.matmul %112, %3, %cst_54 {dimension_numbers = #tpu.dot_dimension_numbers<[1], [0], [0], [1], [0, 0, 1, 1], [], []>} : vector<4x16xf32>, vector<16x8xf32>, vector<4x8xf32> -> vector<4x8xf32>
    %c0_55 = arith.constant 0 : index
    %c48_56 = arith.constant 48 : index
    %114 = vector.load %arg7[%c0_55, %c48_56] : memref<4x64xf32, #tpu.memory_space<vmem>>, vector<4x8xf32>
    tpu.vector_store %arg7[%c0_55, %c48_56], %113 {strides = array<i32>} : memref<4x64xf32, #tpu.memory_space<vmem>>, vector<4x8xf32>,
    %115 = vector.extract_strided_slice %72 {offsets = [0, 224], sizes = [4, 32], strides = [1, 1]} : vector<4x256xf32> to vector<4x32xf32>
    %116 = vector.extract_strided_slice %115 {offsets = [0, 0], sizes = [4, 16], strides = [1, 1]} : vector<4x32xf32> to vector<4x16xf32>
    %117 = vector.extract_strided_slice %115 {offsets = [0, 16], sizes = [4, 16], strides = [1, 1]} : vector<4x32xf32> to vector<4x16xf32>
    %118 = arith.addf %116, %117 : vector<4x16xf32>
    %cst_57 = arith.constant dense<0.000000e+00> : vector<4x8xf32>
    %119 = tpu.matmul %118, %3, %cst_57 {dimension_numbers = #tpu.dot_dimension_numbers<[1], [0], [0], [1], [0, 0, 1, 1], [], []>} : vector<4x16xf32>, vector<16x8xf32>, vector<4x8xf32> -> vector<4x8xf32>
    %c0_58 = arith.constant 0 : index
    %c56_59 = arith.constant 56 : index
    %120 = vector.load %arg7[%c0_58, %c56_59] : memref<4x64xf32, #tpu.memory_space<vmem>>, vector<4x8xf32>
    tpu.vector_store %arg7[%c0_58, %c56_59], %119 {strides = array<i32>} : memref<4x64xf32, #tpu.memory_space<vmem>>, vector<4x8xf32>,
    %c0_60 = arith.constant 0 : index
    %c0_61 = arith.constant 0 : index
    %121 = vector.load %arg7[%c0_60, %c0_61] : memref<4x64xf32, #tpu.memory_space<vmem>>, vector<4x64xf32>
    %cst_62 = arith.constant dense<0.000000e+00> : vector<8x64xf32>
    %122 = tpu.matmul %2, %121, %cst_62 {dimension_numbers = #tpu.dot_dimension_numbers<[1], [0], [0], [1], [0, 0, 1, 1], [], []>} : vector<8x4xf32>, vector<4x64xf32>, vector<8x64xf32> -> vector<8x64xf32>
    %c1_63 = arith.constant 1 : index
    %c0_64 = arith.constant 0 : index
    %c0_65 = arith.constant 0 : index
    %123 = vector.load %arg6[%c1_63, %c0_64, %c0_65] : memref<2x8x64xf32, #tpu.memory_space<vmem>>, vector<1x8x64xf32>
    %124 = vector.shape_cast %123 : vector<1x8x64xf32> to vector<8x64xf32>
    %125 = vector.shape_cast %122 : vector<8x64xf32> to vector<1x8x64xf32>
    tpu.vector_store %arg6[%c1_63, %c0_64, %c0_65], %125 {strides = array<i32>} : memref<2x8x64xf32, #tpu.memory_space<vmem>>, vector<1x8x64xf32>,
    return
  }
  func.func @transform_0(%arg0: i32) -> (i32, i32, i32) {
    %c0_i32 = arith.constant 0 : i32
    %c0_i32_0 = arith.constant 0 : i32
    %c0_i32_1 = arith.constant 0 : i32
    return %arg0, %c0_i32, %c0_i32_0 : i32, i32, i32
  }
  func.func @transform_1(%arg0: i32) -> (i32, i32) {
    %c0_i32 = arith.constant 0 : i32
    %c0_i32_0 = arith.constant 0 : i32
    %c0_i32_1 = arith.constant 0 : i32
    return %c0_i32, %c0_i32_0 : i32, i32
  }
  func.func @transform_2(%arg0: i32) -> (i32, i32) {
    %c0_i32 = arith.constant 0 : i32
    %c0_i32_0 = arith.constant 0 : i32
    %c0_i32_1 = arith.constant 0 : i32
    return %c0_i32, %c0_i32_0 : i32, i32
  }
  func.func @transform_3(%arg0: i32) -> (i32, i32) {
    %c0_i32 = arith.constant 0 : i32
    %c0_i32_0 = arith.constant 0 : i32
    %c0_i32_1 = arith.constant 0 : i32
    return %c0_i32, %c0_i32_0 : i32, i32
  }
  func.func @transform_4(%arg0: i32) -> (i32, i32) {
    %c0_i32 = arith.constant 0 : i32
    %c0_i32_0 = arith.constant 0 : i32
    %c0_i32_1 = arith.constant 0 : i32
    return %c0_i32, %c0_i32_0 : i32, i32
  }
  func.func @transform_5(%arg0: i32) -> (i32, i32, i32) {
    %c0_i32 = arith.constant 0 : i32
    %c0_i32_0 = arith.constant 0 : i32
    %c0_i32_1 = arith.constant 0 : i32
    return %arg0, %c0_i32, %c0_i32_0 : i32, i32, i32
  }
}

</mosaic_0001>

<llo_original>
// kernel: tpu_custom_call.1
$region0: #{tpu_custom_call.1}
  #allocation0 [shape = 'u32[]', space=smem, size = 0x4, offset = 0x4, fixed_abs, tag = 'smem constant byte address 0x4 - core index']
  #allocation1 [shape = 'u32[144,128]{1,0:T(1,128)}', space=vmem, size = 0x12000, scoped, tag = 'internal scratch']
  #allocation2 [shape = 'f32[4,64]{1,0:T(4,128)}', space=vmem, size = 0x800, scoped, tag = 'scratch operand']
  %s0 = inlined_call_operand.vmem [shape: f32[2,4,256], index: 0, kind: input, shape index: {}]
  %s1 = inlined_call_operand.vmem [shape: f32[4,1], index: 1, kind: input, shape index: {}]
  %s2 = inlined_call_operand.vmem [shape: f32[4,1], index: 2, kind: input, shape index: {}]
  %s3 = inlined_call_operand.vmem [shape: f32[8,4], index: 3, kind: input, shape index: {}]
  %s4 = inlined_call_operand.vmem [shape: f32[16,8], index: 4, kind: input, shape index: {}]
  %s5 = inlined_call_operand.hbm [shape: f32[2,8,64], index: 5, kind: output, shape index: {}]
  %s6 = sld [smem:[#allocation0]]
  $region30: #{tpu_custom_call.1} parent=0
    _
  %s8 = ssub.s32 1, %s6
  %s9 = scalar_select 0, %s8, %s6
  $region1: #{tpu_custom_call.1} parent=0
    #allocation3 [shape = 'u8[8192]{0}', space=vmem, size = 0x2000, scoped, tag = 'output window, operand 0, single buffered']
    #allocation4 [shape = 's32[1]{0}', space=sflag, size = 0x4, scoped, tag = 'scoped memory for tpu_custom_call.1']
    %10 = vsyncpa [#allocation4], 0
    // Predicated region
    $region2: #{tpu_custom_call.1} parent=1 // pred_check
      _
    $region3: #{tpu_custom_call.1} parent=1 // pred_check_branch
      %12 = sbr.rel (0) target = $region5
    $region4: #{tpu_custom_call.1} parent=1 // pred_region
      _
    $region5: #{tpu_custom_call.1} parent=1 // pred_fallthru
      _
    // Predicated region
    $region6: #{tpu_custom_call.1} parent=1 // pred_check
      _
    $region7: #{tpu_custom_call.1} parent=1 // pred_check_branch
      %14 = sbr.rel (0) target = $region9
    $region8: #{tpu_custom_call.1} parent=1 // pred_region
      _
    $region9: #{tpu_custom_call.1} parent=1 // pred_fallthru
      _
    // Predicated region
    $region10: #{tpu_custom_call.1} parent=1 // pred_check
      _
    $region11: #{tpu_custom_call.1} parent=1 // pred_check_branch
      %16 = sbr.rel (0) target = $region13
    $region12: #{tpu_custom_call.1} parent=1 // pred_region
      _
    $region13: #{tpu_custom_call.1} parent=1 // pred_fallthru
      _
    // Predicated region
    $region14: #{tpu_custom_call.1} parent=1 // pred_check
      _
    $region15: #{tpu_custom_call.1} parent=1 // pred_check_branch
      %18 = sbr.rel (0) target = $region17
    $region16: #{tpu_custom_call.1} parent=1 // pred_region
      _
    $region17: #{tpu_custom_call.1} parent=1 // pred_fallthru
      _
    // Predicated region
    $region18: #{tpu_custom_call.1} parent=1 // pred_check
      _
    $region19: #{tpu_custom_call.1} parent=1 // pred_check_branch
      %20 = sbr.rel (0) target = $region21
    $region20: #{tpu_custom_call.1} parent=1 // pred_region
      _
    $region21: #{tpu_custom_call.1} parent=1 // pred_fallthru
      _
    %v21 = vld [vmem:[%s1] sm:$0xf]
    %v22 = vld [vmem:[%s2] sm:$0xf]
    %v23 = vld [vmem:[%s3] sm:$0xff]
    %v24 = vld [vmem:[%s4] sm:$0xff]
    %v25 = vld [vmem:[%s4 + $0x8] sm:$0xff]
    %v26 = vld [vmem:[%s0] sm:$0xff]
    %28 = vset.pattern.permute.xlu0 0
    %29 = vperm.xlu0 %28, %v21
    %v30 = vpop.permute.xlu0 %29
    %v32 = vunpack.c.l.s4 839922192
    %v33 = vunpack.c.0.s8 %v32
    %v34 = vlaneseq
    %v35 = vshrl.u32 %v34, 7
    %v36 = vsub.s32 %v33, %v35
    %v37 = vrot.slane %v30, %v36
    %v39 = vmul.f32 %v26, %v37
    %41 = vset.pattern.permute.xlu0 0
    %42 = vperm.xlu0 %41, %v22
    %v43 = vpop.permute.xlu0 %42
    %v45 = vunpack.c.l.s4 839922192
    %v46 = vunpack.c.0.s8 %v45
    %v47 = vlaneseq
    %v48 = vshrl.u32 %v47, 7
    %v49 = vsub.s32 %v46, %v48
    %v50 = vrot.slane %v43, %v49
    %v52 = vadd.f32 %v39, %v50
    %v53 = vmax.f32 %v52, 0.0
    %55 = vrot.lane.b32.xlu0 %v53, 112
    %v56 = vpop.permute.xlu0 %55
    %v58 = vadd.f32 %v53, %v56
    %vm59 = vcmask 130048
    %v61 = vsel %vm59, %v58, 0
    %63 = vmatprep.subr.mxu0 0.0
    %64 = vmatpush1.msra.mxu0 %v24
    %65 = vmatprep.subr.mxu0 0.0
    %66 = vmatpush1.msra.mxu0 %v25
    %67 = vmatprep.subr.mxu0 0.0
    %68 = vmatpush1.msra.mxu0 0.0
    %69 = vmatprep.subr.mxu0 0.0
    %70 = vmatpush1.msra.mxu0 0.0
    %71 = vmatprep.subr.mxu0 0.0
    %72 = vmatpush1.msra.mxu0 0.0
    %73 = vmatprep.subr.mxu0 0.0
    %74 = vmatpush1.msra.mxu0 0.0
    %75 = vmatprep.subr.mxu0 0.0
    %76 = vmatpush1.msra.mxu0 0.0
    %77 = vmatprep.subr.mxu0 0.0
    %78 = vmatpush1.msra.mxu0 0.0
    %79 = vmatprep.subr.mxu0 0.0
    %80 = vmatpush1.msra.mxu0 0.0
    %81 = vmatprep.subr.mxu0 0.0
    %82 = vmatpush1.msra.mxu0 0.0
    %83 = vmatprep.subr.mxu0 0.0
    %84 = vmatpush1.msra.mxu0 0.0
    %85 = vmatprep.subr.mxu0 0.0
    %86 = vmatpush1.msra.mxu0 0.0
    %87 = vmatprep.subr.mxu0 0.0
    %88 = vmatpush1.msra.mxu0 0.0
    %89 = vmatprep.subr.mxu0 0.0
    %90 = vmatpush1.msra.mxu0 0.0
    %91 = vmatprep.subr.mxu0 0.0
    %92 = vmatpush1.msra.mxu0 0.0
    %93 = vmatprep.subr.mxu0 0.0
    %94 = vmatpush1.msra.mxu0 0.0
    %95 = vmatprep.subr.mxu0 0.0
    %96 = vmatpush1.msra.mxu0 0.0
    %97 = vmatprep.subr.mxu0 0.0
    %98 = vmatpush1.msra.mxu0 0.0
    %99 = vmatprep.subr.mxu0 0.0
    %100 = vmatpush1.msra.mxu0 0.0
    %101 = vmatprep.subr.mxu0 0.0
    %102 = vmatpush1.msra.mxu0 0.0
    %103 = vmatprep.subr.mxu0 0.0
    %104 = vmatpush1.msra.mxu0 0.0
    %105 = vmatprep.subr.mxu0 0.0
    %106 = vmatpush1.msra.mxu0 0.0
    %107 = vmatprep.subr.mxu0 0.0
    %108 = vmatpush1.msra.mxu0 0.0
    %109 = vmatprep.subr.mxu0 0.0
    %110 = vmatpush1.msra.mxu0 0.0
    %111 = vmatprep.subr.mxu0 0.0
    %112 = vmatpush1.msra.mxu0 0.0
    %113 = vmatprep.subr.mxu0 0.0
    %114 = vmatpush1.msra.mxu0 0.0
    %115 = vmatprep.subr.mxu0 0.0
    %116 = vmatpush1.msra.mxu0 0.0
    %117 = vmatprep.subr.mxu0 0.0
    %118 = vmatpush1.msra.mxu0 0.0
    %119 = vmatprep.subr.mxu0 0.0
    %120 = vmatpush1.msra.mxu0 0.0
    %121 = vmatprep.subr.mxu0 0.0
    %122 = vmatpush1.msra.mxu0 0.0
    %123 = vmatprep.subr.mxu0 0.0
    %124 = vmatpush1.msra.mxu0 0.0
    %125 = vmatprep.subr.mxu0 0.0
    %126 = vmatpush1.msra.mxu0 0.0
    %127 = vmatprep.mubr.f32.mxu0 0.0
    %128 = vmatmul.mubr.f32.gmra.mrb[0].mxu0 %v61
    %v129 = vpop.f32.mrb[0].mxu0
    %v130 = vadd.f32 0.0, %v129
    %v131 = vpop.f32.mrb[0].mxu0
    %132 = vdwg.mxu0
    %vm133 = vcmask 60416
    %134 = vst.msk [vmem:[#allocation2] sm:$0xf] %vm133, %v130
    %135 = vrot.lane.b32.xlu0 %v58, 96
    %v136 = vpop.permute.xlu0 %135
    %v137 = vsel %vm59, %v136, 0
    %139 = vmatprep.subr.mxu0 0.0
    %140 = vmatpush1.msra.mxu0 %v24
    %141 = vmatprep.subr.mxu0 0.0
    %142 = vmatpush1.msra.mxu0 %v25
    %143 = vmatprep.subr.mxu0 0.0
    %144 = vmatpush1.msra.mxu0 0.0
    %145 = vmatprep.subr.mxu0 0.0
    %146 = vmatpush1.msra.mxu0 0.0
    %147 = vmatprep.subr.mxu0 0.0
    %148 = vmatpush1.msra.mxu0 0.0
    %149 = vmatprep.subr.mxu0 0.0
    %150 = vmatpush1.msra.mxu0 0.0
    %151 = vmatprep.subr.mxu0 0.0
    %152 = vmatpush1.msra.mxu0 0.0
    %153 = vmatprep.subr.mxu0 0.0
    %154 = vmatpush1.msra.mxu0 0.0
    %155 = vmatprep.subr.mxu0 0.0
    %156 = vmatpush1.msra.mxu0 0.0
    %157 = vmatprep.subr.mxu0 0.0
    %158 = vmatpush1.msra.mxu0 0.0
    %159 = vmatprep.subr.mxu0 0.0
    %160 = vmatpush1.msra.mxu0 0.0
    %161 = vmatprep.subr.mxu0 0.0
    %162 = vmatpush1.msra.mxu0 0.0
    %163 = vmatprep.subr.mxu0 0.0
    %164 = vmatpush1.msra.mxu0 0.0
    %165 = vmatprep.subr.mxu0 0.0
    %166 = vmatpush1.msra.mxu0 0.0
    %167 = vmatprep.subr.mxu0 0.0
    %168 = vmatpush1.msra.mxu0 0.0
    %169 = vmatprep.subr.mxu0 0.0
    %170 = vmatpush1.msra.mxu0 0.0
    %171 = vmatprep.subr.mxu0 0.0
    %172 = vmatpush1.msra.mxu0 0.0
    %173 = vmatprep.subr.mxu0 0.0
    %174 = vmatpush1.msra.mxu0 0.0
    %175 = vmatprep.subr.mxu0 0.0
    %176 = vmatpush1.msra.mxu0 0.0
    %177 = vmatprep.subr.mxu0 0.0
    %178 = vmatpush1.msra.mxu0 0.0
    %179 = vmatprep.subr.mxu0 0.0
    %180 = vmatpush1.msra.mxu0 0.0
    %181 = vmatprep.subr.mxu0 0.0
    %182 = vmatpush1.msra.mxu0 0.0
    %183 = vmatprep.subr.mxu0 0.0
    %184 = vmatpush1.msra.mxu0 0.0
    %185 = vmatprep.subr.mxu0 0.0
    %186 = vmatpush1.msra.mxu0 0.0
    %187 = vmatprep.subr.mxu0 0.0
    %188 = vmatpush1.msra.mxu0 0.0
    %189 = vmatprep.subr.mxu0 0.0
    %190 = vmatpush1.msra.mxu0 0.0
    %191 = vmatprep.subr.mxu0 0.0
    %192 = vmatpush1.msra.mxu0 0.0
    %193 = vmatprep.subr.mxu0 0.0
    %194 = vmatpush1.msra.mxu0 0.0
    %195 = vmatprep.subr.mxu0 0.0
    %196 = vmatpush1.msra.mxu0 0.0
    %197 = vmatprep.subr.mxu0 0.0
    %198 = vmatpush1.msra.mxu0 0.0
    %199 = vmatprep.subr.mxu0 0.0
    %200 = vmatpush1.msra.mxu0 0.0
    %201 = vmatprep.subr.mxu0 0.0
    %202 = vmatpush1.msra.mxu0 0.0
    %203 = vmatprep.mubr.f32.mxu0 0.0
    %204 = vmatmul.mubr.f32.gmra.mrb[0].mxu0 %v137
    %v205 = vpop.f32.mrb[0].mxu0
    %v206 = vadd.f32 0.0, %v205
    %v207 = vpop.f32.mrb[0].mxu0
    %208 = vdwg.mxu0
    %210 = vrot.lane.b32.xlu0 %v206, 8
    %v211 = vpop.permute.xlu0 %210
    %vm213 = vcmask 126016
    %214 = vst.msk [vmem:[#allocation2] sm:$0xf] %vm213, %v211
    %215 = vrot.lane.b32.xlu0 %v58, 64
    %v216 = vpop.permute.xlu0 %215
    %v217 = vsel %vm59, %v216, 0
    %219 = vmatprep.subr.mxu0 0.0
    %220 = vmatpush1.msra.mxu0 %v24
    %221 = vmatprep.subr.mxu0 0.0
    %222 = vmatpush1.msra.mxu0 %v25
    %223 = vmatprep.subr.mxu0 0.0
    %224 = vmatpush1.msra.mxu0 0.0
    %225 = vmatprep.subr.mxu0 0.0
    %226 = vmatpush1.msra.mxu0 0.0
    %227 = vmatprep.subr.mxu0 0.0
    %228 = vmatpush1.msra.mxu0 0.0
    %229 = vmatprep.subr.mxu0 0.0
    %230 = vmatpush1.msra.mxu0 0.0
    %231 = vmatprep.subr.mxu0 0.0
    %232 = vmatpush1.msra.mxu0 0.0
    %233 = vmatprep.subr.mxu0 0.0
    %234 = vmatpush1.msra.mxu0 0.0
    %235 = vmatprep.subr.mxu0 0.0
    %236 = vmatpush1.msra.mxu0 0.0
    %237 = vmatprep.subr.mxu0 0.0
    %238 = vmatpush1.msra.mxu0 0.0
    %239 = vmatprep.subr.mxu0 0.0
    %240 = vmatpush1.msra.mxu0 0.0
    %241 = vmatprep.subr.mxu0 0.0
    %242 = vmatpush1.msra.mxu0 0.0
    %243 = vmatprep.subr.mxu0 0.0
    %244 = vmatpush1.msra.mxu0 0.0
    %245 = vmatprep.subr.mxu0 0.0
    %246 = vmatpush1.msra.mxu0 0.0
    %247 = vmatprep.subr.mxu0 0.0
    %248 = vmatpush1.msra.mxu0 0.0
    %249 = vmatprep.subr.mxu0 0.0
    %250 = vmatpush1.msra.mxu0 0.0
    %251 = vmatprep.subr.mxu0 0.0
    %252 = vmatpush1.msra.mxu0 0.0
    %253 = vmatprep.subr.mxu0 0.0
    %254 = vmatpush1.msra.mxu0 0.0
    %255 = vmatprep.subr.mxu0 0.0
    %256 = vmatpush1.msra.mxu0 0.0
    %257 = vmatprep.subr.mxu0 0.0
    %258 = vmatpush1.msra.mxu0 0.0
    %259 = vmatprep.subr.mxu0 0.0
    %260 = vmatpush1.msra.mxu0 0.0
    %261 = vmatprep.subr.mxu0 0.0
    %262 = vmatpush1.msra.mxu0 0.0
    %263 = vmatprep.subr.mxu0 0.0
    %264 = vmatpush1.msra.mxu0 0.0
    %265 = vmatprep.subr.mxu0 0.0
    %266 = vmatpush1.msra.mxu0 0.0
    %267 = vmatprep.subr.mxu0 0.0
    %268 = vmatpush1.msra.mxu0 0.0
    %269 = vmatprep.subr.mxu0 0.0
    %270 = vmatpush1.msra.mxu0 0.0
    %271 = vmatprep.subr.mxu0 0.0
    %272 = vmatpush1.msra.mxu0 0.0
    %273 = vmatprep.subr.mxu0 0.0
    %274 = vmatpush1.msra.mxu0 0.0
    %275 = vmatprep.subr.mxu0 0.0
    %276 = vmatpush1.msra.mxu0 0.0
    %277 = vmatprep.subr.mxu0 0.0
    %278 = vmatpush1.msra.mxu0 0.0
    %279 = vmatprep.subr.mxu0 0.0
    %280 = vmatpush1.msra.mxu0 0.0
    %281 = vmatprep.subr.mxu0 0.0
    %282 = vmatpush1.msra.mxu0 0.0
    %283 = vmatprep.mubr.f32.mxu0 0.0
    %284 = vmatmul.mubr.f32.gmra.mrb[0].mxu0 %v217
    %v285 = vpop.f32.mrb[0].mxu0
    %v286 = vadd.f32 0.0, %v285
    %v287 = vpop.f32.mrb[0].mxu0
    %288 = vdwg.mxu0
    %290 = vrot.lane.b32.xlu0 %v286, 16
    %v291 = vpop.permute.xlu0 %290
    %vm293 = vcmask 191616
    %294 = vst.msk [vmem:[#allocation2] sm:$0xf] %vm293, %v291
    %295 = vrot.lane.b32.xlu0 %v58, 32
    %v296 = vpop.permute.xlu0 %295
    %v297 = vsel %vm59, %v296, 0
    %299 = vmatprep.subr.mxu0 0.0
    %300 = vmatpush1.msra.mxu0 %v24
    %301 = vmatprep.subr.mxu0 0.0
    %302 = vmatpush1.msra.mxu0 %v25
    %303 = vmatprep.subr.mxu0 0.0
    %304 = vmatpush1.msra.mxu0 0.0
    %305 = vmatprep.subr.mxu0 0.0
    %306 = vmatpush1.msra.mxu0 0.0
    %307 = vmatprep.subr.mxu0 0.0
    %308 = vmatpush1.msra.mxu0 0.0
    %309 = vmatprep.subr.mxu0 0.0
    %310 = vmatpush1.msra.mxu0 0.0
    %311 = vmatprep.subr.mxu0 0.0
    %312 = vmatpush1.msra.mxu0 0.0
    %313 = vmatprep.subr.mxu0 0.0
    %314 = vmatpush1.msra.mxu0 0.0
    %315 = vmatprep.subr.mxu0 0.0
    %316 = vmatpush1.msra.mxu0 0.0
    %317 = vmatprep.subr.mxu0 0.0
    %318 = vmatpush1.msra.mxu0 0.0
    %319 = vmatprep.subr.mxu0 0.0
    %320 = vmatpush1.msra.mxu0 0.0
    %321 = vmatprep.subr.mxu0 0.0
    %322 = vmatpush1.msra.mxu0 0.0
    %323 = vmatprep.subr.mxu0 0.0
    %324 = vmatpush1.msra.mxu0 0.0
    %325 = vmatprep.subr.mxu0 0.0
    %326 = vmatpush1.msra.mxu0 0.0
    %327 = vmatprep.subr.mxu0 0.0
    %328 = vmatpush1.msra.mxu0 0.0
    %329 = vmatprep.subr.mxu0 0.0
    %330 = vmatpush1.msra.mxu0 0.0
    %331 = vmatprep.subr.mxu0 0.0
    %332 = vmatpush1.msra.mxu0 0.0
    %333 = vmatprep.subr.mxu0 0.0
    %334 = vmatpush1.msra.mxu0 0.0
    %335 = vmatprep.subr.mxu0 0.0
    %336 = vmatpush1.msra.mxu0 0.0
    %337 = vmatprep.subr.mxu0 0.0
    %338 = vmatpush1.msra.mxu0 0.0
    %339 = vmatprep.subr.mxu0 0.0
    %340 = vmatpush1.msra.mxu0 0.0
    %341 = vmatprep.subr.mxu0 0.0
    %342 = vmatpush1.msra.mxu0 0.0
    %343 = vmatprep.subr.mxu0 0.0
    %344 = vmatpush1.msra.mxu0 0.0
    %345 = vmatprep.subr.mxu0 0.0
    %346 = vmatpush1.msra.mxu0 0.0
    %347 = vmatprep.subr.mxu0 0.0
    %348 = vmatpush1.msra.mxu0 0.0
    %349 = vmatprep.subr.mxu0 0.0
    %350 = vmatpush1.msra.mxu0 0.0
    %351 = vmatprep.subr.mxu0 0.0
    %352 = vmatpush1.msra.mxu0 0.0
    %353 = vmatprep.subr.mxu0 0.0
    %354 = vmatpush1.msra.mxu0 0.0
    %355 = vmatprep.subr.mxu0 0.0
    %356 = vmatpush1.msra.mxu0 0.0
    %357 = vmatprep.subr.mxu0 0.0
    %358 = vmatpush1.msra.mxu0 0.0
    %359 = vmatprep.subr.mxu0 0.0
    %360 = vmatpush1.msra.mxu0 0.0
    %361 = vmatprep.subr.mxu0 0.0
    %362 = vmatpush1.msra.mxu0 0.0
    %363 = vmatprep.mubr.f32.mxu0 0.0
    %364 = vmatmul.mubr.f32.gmra.mrb[0].mxu0 %v297
    %v365 = vpop.f32.mrb[0].mxu0
    %v366 = vadd.f32 0.0, %v365
    %v367 = vpop.f32.mrb[0].mxu0
    %368 = vdwg.mxu0
    %370 = vrot.lane.b32.xlu0 %v366, 24
    %v371 = vpop.permute.xlu0 %370
    %vm373 = vcmask 257216
    %374 = vst.msk [vmem:[#allocation2] sm:$0xf] %vm373, %v371
    %v375 = vrot.slane %v53, 4
    %v377 = vrot.slane %v56, 4
    %v379 = vadd.f32 %v375, %v377
    %v381 = vsel %vm59, %v379, 0
    %383 = vmatprep.subr.mxu0 0.0
    %384 = vmatpush1.msra.mxu0 %v24
    %385 = vmatprep.subr.mxu0 0.0
    %386 = vmatpush1.msra.mxu0 %v25
    %387 = vmatprep.subr.mxu0 0.0
    %388 = vmatpush1.msra.mxu0 0.0
    %389 = vmatprep.subr.mxu0 0.0
    %390 = vmatpush1.msra.mxu0 0.0
    %391 = vmatprep.subr.mxu0 0.0
    %392 = vmatpush1.msra.mxu0 0.0
    %393 = vmatprep.subr.mxu0 0.0
    %394 = vmatpush1.msra.mxu0 0.0
    %395 = vmatprep.subr.mxu0 0.0
    %396 = vmatpush1.msra.mxu0 0.0
    %397 = vmatprep.subr.mxu0 0.0
    %398 = vmatpush1.msra.mxu0 0.0
    %399 = vmatprep.subr.mxu0 0.0
    %400 = vmatpush1.msra.mxu0 0.0
    %401 = vmatprep.subr.mxu0 0.0
    %402 = vmatpush1.msra.mxu0 0.0
    %403 = vmatprep.subr.mxu0 0.0
    %404 = vmatpush1.msra.mxu0 0.0
    %405 = vmatprep.subr.mxu0 0.0
    %406 = vmatpush1.msra.mxu0 0.0
    %407 = vmatprep.subr.mxu0 0.0
    %408 = vmatpush1.msra.mxu0 0.0
    %409 = vmatprep.subr.mxu0 0.0
    %410 = vmatpush1.msra.mxu0 0.0
    %411 = vmatprep.subr.mxu0 0.0
    %412 = vmatpush1.msra.mxu0 0.0
    %413 = vmatprep.subr.mxu0 0.0
    %414 = vmatpush1.msra.mxu0 0.0
    %415 = vmatprep.subr.mxu0 0.0
    %416 = vmatpush1.msra.mxu0 0.0
    %417 = vmatprep.subr.mxu0 0.0
    %418 = vmatpush1.msra.mxu0 0.0
    %419 = vmatprep.subr.mxu0 0.0
    %420 = vmatpush1.msra.mxu0 0.0
    %421 = vmatprep.subr.mxu0 0.0
    %422 = vmatpush1.msra.mxu0 0.0
    %423 = vmatprep.subr.mxu0 0.0
    %424 = vmatpush1.msra.mxu0 0.0
    %425 = vmatprep.subr.mxu0 0.0
    %426 = vmatpush1.msra.mxu0 0.0
    %427 = vmatprep.subr.mxu0 0.0
    %428 = vmatpush1.msra.mxu0 0.0
    %429 = vmatprep.subr.mxu0 0.0
    %430 = vmatpush1.msra.mxu0 0.0
    %431 = vmatprep.subr.mxu0 0.0
    %432 = vmatpush1.msra.mxu0 0.0
    %433 = vmatprep.subr.mxu0 0.0
    %434 = vmatpush1.msra.mxu0 0.0
    %435 = vmatprep.subr.mxu0 0.0
    %436 = vmatpush1.msra.mxu0 0.0
    %437 = vmatprep.subr.mxu0 0.0
    %438 = vmatpush1.msra.mxu0 0.0
    %439 = vmatprep.subr.mxu0 0.0
    %440 = vmatpush1.msra.mxu0 0.0
    %441 = vmatprep.subr.mxu0 0.0
    %442 = vmatpush1.msra.mxu0 0.0
    %443 = vmatprep.subr.mxu0 0.0
    %444 = vmatpush1.msra.mxu0 0.0
    %445 = vmatprep.subr.mxu0 0.0
    %446 = vmatpush1.msra.mxu0 0.0
    %447 = vmatprep.mubr.f32.mxu0 0.0
    %448 = vmatmul.mubr.f32.gmra.mrb[0].mxu0 %v381
    %v449 = vpop.f32.mrb[0].mxu0
    %v450 = vadd.f32 0.0, %v449
    %v451 = vpop.f32.mrb[0].mxu0
    %452 = vdwg.mxu0
    %454 = vrot.lane.b32.xlu0 %v450, 32
    %v455 = vpop.permute.xlu0 %454
    %vm457 = vcmask 322816
    %458 = vst.msk [vmem:[#allocation2] sm:$0xf] %vm457, %v455
    %459 = vrot.lane.b32.xlu0 %v53, 96
    %v460 = vpop.permute.xlu0 %459
    %v461 = vrot.slane %v460, 4
    %463 = vrot.lane.b32.xlu0 %v53, 80
    %v464 = vpop.permute.xlu0 %463
    %v465 = vrot.slane %v464, 4
    %v467 = vadd.f32 %v461, %v465
    %v469 = vsel %vm59, %v467, 0
    %471 = vmatprep.subr.mxu0 0.0
    %472 = vmatpush1.msra.mxu0 %v24
    %473 = vmatprep.subr.mxu0 0.0
    %474 = vmatpush1.msra.mxu0 %v25
    %475 = vmatprep.subr.mxu0 0.0
    %476 = vmatpush1.msra.mxu0 0.0
    %477 = vmatprep.subr.mxu0 0.0
    %478 = vmatpush1.msra.mxu0 0.0
    %479 = vmatprep.subr.mxu0 0.0
    %480 = vmatpush1.msra.mxu0 0.0
    %481 = vmatprep.subr.mxu0 0.0
    %482 = vmatpush1.msra.mxu0 0.0
    %483 = vmatprep.subr.mxu0 0.0
    %484 = vmatpush1.msra.mxu0 0.0
    %485 = vmatprep.subr.mxu0 0.0
    %486 = vmatpush1.msra.mxu0 0.0
    %487 = vmatprep.subr.mxu0 0.0
    %488 = vmatpush1.msra.mxu0 0.0
    %489 = vmatprep.subr.mxu0 0.0
    %490 = vmatpush1.msra.mxu0 0.0
    %491 = vmatprep.subr.mxu0 0.0
    %492 = vmatpush1.msra.mxu0 0.0
    %493 = vmatprep.subr.mxu0 0.0
    %494 = vmatpush1.msra.mxu0 0.0
    %495 = vmatprep.subr.mxu0 0.0
    %496 = vmatpush1.msra.mxu0 0.0
    %497 = vmatprep.subr.mxu0 0.0
    %498 = vmatpush1.msra.mxu0 0.0
    %499 = vmatprep.subr.mxu0 0.0
    %500 = vmatpush1.msra.mxu0 0.0
    %501 = vmatprep.subr.mxu0 0.0
    %502 = vmatpush1.msra.mxu0 0.0
    %503 = vmatprep.subr.mxu0 0.0
    %504 = vmatpush1.msra.mxu0 0.0
    %505 = vmatprep.subr.mxu0 0.0
    %506 = vmatpush1.msra.mxu0 0.0
    %507 = vmatprep.subr.mxu0 0.0
    %508 = vmatpush1.msra.mxu0 0.0
    %509 = vmatprep.subr.mxu0 0.0
    %510 = vmatpush1.msra.mxu0 0.0
    %511 = vmatprep.subr.mxu0 0.0
    %512 = vmatpush1.msra.mxu0 0.0
    %513 = vmatprep.subr.mxu0 0.0
    %514 = vmatpush1.msra.mxu0 0.0
    %515 = vmatprep.subr.mxu0 0.0
    %516 = vmatpush1.msra.mxu0 0.0
    %517 = vmatprep.subr.mxu0 0.0
    %518 = vmatpush1.msra.mxu0 0.0
    %519 = vmatprep.subr.mxu0 0.0
    %520 = vmatpush1.msra.mxu0 0.0
    %521 = vmatprep.subr.mxu0 0.0
    %522 = vmatpush1.msra.mxu0 0.0
    %523 = vmatprep.subr.mxu0 0.0
    %524 = vmatpush1.msra.mxu0 0.0
    %525 = vmatprep.subr.mxu0 0.0
    %526 = vmatpush1.msra.mxu0 0.0
    %527 = vmatprep.subr.mxu0 0.0
    %528 = vmatpush1.msra.mxu0 0.0
    %529 = vmatprep.subr.mxu0 0.0
    %530 = vmatpush1.msra.mxu0 0.0
    %531 = vmatprep.subr.mxu0 0.0
    %532 = vmatpush1.msra.mxu0 0.0
    %533 = vmatprep.subr.mxu0 0.0
    %534 = vmatpush1.msra.mxu0 0.0
    %535 = vmatprep.mubr.f32.mxu0 0.0
    %536 = vmatmul.mubr.f32.gmra.mrb[0].mxu0 %v469
    %v537 = vpop.f32.mrb[0].mxu0
    %v538 = vadd.f32 0.0, %v537
    %v539 = vpop.f32.mrb[0].mxu0
    %540 = vdwg.mxu0
    %542 = vrot.lane.b32.xlu0 %v538, 40
    %v543 = vpop.permute.xlu0 %542
    %vm545 = vcmask 388416
    %546 = vst.msk [vmem:[#allocation2] sm:$0xf] %vm545, %v543
    %547 = vrot.lane.b32.xlu0 %v53, 64
    %v548 = vpop.permute.xlu0 %547
    %v549 = vrot.slane %v548, 4
    %551 = vrot.lane.b32.xlu0 %v53, 48
    %v552 = vpop.permute.xlu0 %551
    %v553 = vrot.slane %v552, 4
    %v555 = vadd.f32 %v549, %v553
    %v557 = vsel %vm59, %v555, 0
    %559 = vmatprep.subr.mxu0 0.0
    %560 = vmatpush1.msra.mxu0 %v24
    %561 = vmatprep.subr.mxu0 0.0
    %562 = vmatpush1.msra.mxu0 %v25
    %563 = vmatprep.subr.mxu0 0.0
    %564 = vmatpush1.msra.mxu0 0.0
    %565 = vmatprep.subr.mxu0 0.0
    %566 = vmatpush1.msra.mxu0 0.0
    %567 = vmatprep.subr.mxu0 0.0
    %568 = vmatpush1.msra.mxu0 0.0
    %569 = vmatprep.subr.mxu0 0.0
    %570 = vmatpush1.msra.mxu0 0.0
    %571 = vmatprep.subr.mxu0 0.0
    %572 = vmatpush1.msra.mxu0 0.0
    %573 = vmatprep.subr.mxu0 0.0
    %574 = vmatpush1.msra.mxu0 0.0
    %575 = vmatprep.subr.mxu0 0.0
    %576 = vmatpush1.msra.mxu0 0.0
    %577 = vmatprep.subr.mxu0 0.0
    %578 = vmatpush1.msra.mxu0 0.0
    %579 = vmatprep.subr.mxu0 0.0
    %580 = vmatpush1.msra.mxu0 0.0
    %581 = vmatprep.subr.mxu0 0.0
    %582 = vmatpush1.msra.mxu0 0.0
    %583 = vmatprep.subr.mxu0 0.0
    %584 = vmatpush1.msra.mxu0 0.0
    %585 = vmatprep.subr.mxu0 0.0
    %586 = vmatpush1.msra.mxu0 0.0
    %587 = vmatprep.subr.mxu0 0.0
    %588 = vmatpush1.msra.mxu0 0.0
    %589 = vmatprep.subr.mxu0 0.0
    %590 = vmatpush1.msra.mxu0 0.0
    %591 = vmatprep.subr.mxu0 0.0
    %592 = vmatpush1.msra.mxu0 0.0
    %593 = vmatprep.subr.mxu0 0.0
    %594 = vmatpush1.msra.mxu0 0.0
    %595 = vmatprep.subr.mxu0 0.0
    %596 = vmatpush1.msra.mxu0 0.0
    %597 = vmatprep.subr.mxu0 0.0
    %598 = vmatpush1.msra.mxu0 0.0
    %599 = vmatprep.subr.mxu0 0.0
    %600 = vmatpush1.msra.mxu0 0.0
    %601 = vmatprep.subr.mxu0 0.0
    %602 = vmatpush1.msra.mxu0 0.0
    %603 = vmatprep.subr.mxu0 0.0
    %604 = vmatpush1.msra.mxu0 0.0
    %605 = vmatprep.subr.mxu0 0.0
    %606 = vmatpush1.msra.mxu0 0.0
    %607 = vmatprep.subr.mxu0 0.0
    %608 = vmatpush1.msra.mxu0 0.0
    %609 = vmatprep.subr.mxu0 0.0
    %610 = vmatpush1.msra.mxu0 0.0
    %611 = vmatprep.subr.mxu0 0.0
    %612 = vmatpush1.msra.mxu0 0.0
    %613 = vmatprep.subr.mxu0 0.0
    %614 = vmatpush1.msra.mxu0 0.0
    %615 = vmatprep.subr.mxu0 0.0
    %616 = vmatpush1.msra.mxu0 0.0
    %617 = vmatprep.subr.mxu0 0.0
    %618 = vmatpush1.msra.mxu0 0.0
    %619 = vmatprep.subr.mxu0 0.0
    %620 = vmatpush1.msra.mxu0 0.0
    %621 = vmatprep.subr.mxu0 0.0
    %622 = vmatpush1.msra.mxu0 0.0
    %623 = vmatprep.mubr.f32.mxu0 0.0
    %624 = vmatmul.mubr.f32.gmra.mrb[0].mxu0 %v557
    %v625 = vpop.f32.mrb[0].mxu0
    %v626 = vadd.f32 0.0, %v625
    %v627 = vpop.f32.mrb[0].mxu0
    %628 = vdwg.mxu0
    %630 = vrot.lane.b32.xlu0 %v626, 48
    %v631 = vpop.permute.xlu0 %630
    %vm633 = vcmask 454016
    %634 = vst.msk [vmem:[#allocation2] sm:$0xf] %vm633, %v631
    %635 = vrot.lane.b32.xlu0 %v53, 32
    %v636 = vpop.permute.xlu0 %635
    %v637 = vrot.slane %v636, 4
    %639 = vrot.lane.b32.xlu0 %v53, 16
    %v640 = vpop.permute.xlu0 %639
    %v641 = vrot.slane %v640, 4
    %v643 = vadd.f32 %v637, %v641
    %v645 = vsel %vm59, %v643, 0
    %647 = vmatprep.subr.mxu0 0.0
    %648 = vmatpush1.msra.mxu0 %v24
    %649 = vmatprep.subr.mxu0 0.0
    %650 = vmatpush1.msra.mxu0 %v25
    %651 = vmatprep.subr.mxu0 0.0
    %652 = vmatpush1.msra.mxu0 0.0
    %653 = vmatprep.subr.mxu0 0.0
    %654 = vmatpush1.msra.mxu0 0.0
    %655 = vmatprep.subr.mxu0 0.0
    %656 = vmatpush1.msra.mxu0 0.0
    %657 = vmatprep.subr.mxu0 0.0
    %658 = vmatpush1.msra.mxu0 0.0
    %659 = vmatprep.subr.mxu0 0.0
    %660 = vmatpush1.msra.mxu0 0.0
    %661 = vmatprep.subr.mxu0 0.0
    %662 = vmatpush1.msra.mxu0 0.0
    %663 = vmatprep.subr.mxu0 0.0
    %664 = vmatpush1.msra.mxu0 0.0
    %665 = vmatprep.subr.mxu0 0.0
    %666 = vmatpush1.msra.mxu0 0.0
    %667 = vmatprep.subr.mxu0 0.0
    %668 = vmatpush1.msra.mxu0 0.0
    %669 = vmatprep.subr.mxu0 0.0
    %670 = vmatpush1.msra.mxu0 0.0
    %671 = vmatprep.subr.mxu0 0.0
    %672 = vmatpush1.msra.mxu0 0.0
    %673 = vmatprep.subr.mxu0 0.0
    %674 = vmatpush1.msra.mxu0 0.0
    %675 = vmatprep.subr.mxu0 0.0
    %676 = vmatpush1.msra.mxu0 0.0
    %677 = vmatprep.subr.mxu0 0.0
    %678 = vmatpush1.msra.mxu0 0.0
    %679 = vmatprep.subr.mxu0 0.0
    %680 = vmatpush1.msra.mxu0 0.0
    %681 = vmatprep.subr.mxu0 0.0
    %682 = vmatpush1.msra.mxu0 0.0
    %683 = vmatprep.subr.mxu0 0.0
    %684 = vmatpush1.msra.mxu0 0.0
    %685 = vmatprep.subr.mxu0 0.0
    %686 = vmatpush1.msra.mxu0 0.0
    %687 = vmatprep.subr.mxu0 0.0
    %688 = vmatpush1.msra.mxu0 0.0
    %689 = vmatprep.subr.mxu0 0.0
    %690 = vmatpush1.msra.mxu0 0.0
    %691 = vmatprep.subr.mxu0 0.0
    %692 = vmatpush1.msra.mxu0 0.0
    %693 = vmatprep.subr.mxu0 0.0
    %694 = vmatpush1.msra.mxu0 0.0
    %695 = vmatprep.subr.mxu0 0.0
    %696 = vmatpush1.msra.mxu0 0.0
    %697 = vmatprep.subr.mxu0 0.0
    %698 = vmatpush1.msra.mxu0 0.0
    %699 = vmatprep.subr.mxu0 0.0
    %700 = vmatpush1.msra.mxu0 0.0
    %701 = vmatprep.subr.mxu0 0.0
    %702 = vmatpush1.msra.mxu0 0.0
    %703 = vmatprep.subr.mxu0 0.0
    %704 = vmatpush1.msra.mxu0 0.0
    %705 = vmatprep.subr.mxu0 0.0
    %706 = vmatpush1.msra.mxu0 0.0
    %707 = vmatprep.subr.mxu0 0.0
    %708 = vmatpush1.msra.mxu0 0.0
    %709 = vmatprep.subr.mxu0 0.0
    %710 = vmatpush1.msra.mxu0 0.0
    %711 = vmatprep.mubr.f32.mxu0 0.0
    %712 = vmatmul.mubr.f32.gmra.mrb[0].mxu0 %v645
    %v713 = vpop.f32.mrb[0].mxu0
    %v714 = vadd.f32 0.0, %v713
    %v715 = vpop.f32.mrb[0].mxu0
    %716 = vdwg.mxu0
    %718 = vrot.lane.b32.xlu0 %v714, 56
    %v719 = vpop.permute.xlu0 %718
    %vm721 = vcmask 519616
    %722 = vst.msk [vmem:[#allocation2] sm:$0xf] %vm721, %v719
    %v723 = vld [vmem:[#allocation2] sm:$0xf]
    %vm724 = vcmask 31744
    %v726 = vsel %vm724, %v23, 0
    %vm728 = vcmask 1043456
    %v730 = vsel %vm728, %v723, 0
    %732 = vmatprep.subr.mxu0 0.0
    %733 = vmatpush1.msra.mxu0 %v730
    %734 = vmatprep.subr.mxu0 0.0
    %735 = vmatpush1.msra.mxu0 0.0
    %736 = vmatprep.subr.mxu0 0.0
    %737 = vmatpush1.msra.mxu0 0.0
    %738 = vmatprep.subr.mxu0 0.0
    %739 = vmatpush1.msra.mxu0 0.0
    %740 = vmatprep.subr.mxu0 0.0
    %741 = vmatpush1.msra.mxu0 0.0
    %742 = vmatprep.subr.mxu0 0.0
    %743 = vmatpush1.msra.mxu0 0.0
    %744 = vmatprep.subr.mxu0 0.0
    %745 = vmatpush1.msra.mxu0 0.0
    %746 = vmatprep.subr.mxu0 0.0
    %747 = vmatpush1.msra.mxu0 0.0
    %748 = vmatprep.subr.mxu0 0.0
    %749 = vmatpush1.msra.mxu0 0.0
    %750 = vmatprep.subr.mxu0 0.0
    %751 = vmatpush1.msra.mxu0 0.0
    %752 = vmatprep.subr.mxu0 0.0
    %753 = vmatpush1.msra.mxu0 0.0
    %754 = vmatprep.subr.mxu0 0.0
    %755 = vmatpush1.msra.mxu0 0.0
    %756 = vmatprep.subr.mxu0 0.0
    %757 = vmatpush1.msra.mxu0 0.0
    %758 = vmatprep.subr.mxu0 0.0
    %759 = vmatpush1.msra.mxu0 0.0
    %760 = vmatprep.subr.mxu0 0.0
    %761 = vmatpush1.msra.mxu0 0.0
    %762 = vmatprep.subr.mxu0 0.0
    %763 = vmatpush1.msra.mxu0 0.0
    %764 = vmatprep.subr.mxu0 0.0
    %765 = vmatpush1.msra.mxu0 0.0
    %766 = vmatprep.subr.mxu0 0.0
    %767 = vmatpush1.msra.mxu0 0.0
    %768 = vmatprep.subr.mxu0 0.0
    %769 = vmatpush1.msra.mxu0 0.0
    %770 = vmatprep.subr.mxu0 0.0
    %771 = vmatpush1.msra.mxu0 0.0
    %772 = vmatprep.subr.mxu0 0.0
    %773 = vmatpush1.msra.mxu0 0.0
    %774 = vmatprep.subr.mxu0 0.0
    %775 = vmatpush1.msra.mxu0 0.0
    %776 = vmatprep.subr.mxu0 0.0
    %777 = vmatpush1.msra.mxu0 0.0
    %778 = vmatprep.subr.mxu0 0.0
    %779 = vmatpush1.msra.mxu0 0.0
    %780 = vmatprep.subr.mxu0 0.0
    %781 = vmatpush1.msra.mxu0 0.0
    %782 = vmatprep.subr.mxu0 0.0
    %783 = vmatpush1.msra.mxu0 0.0
    %784 = vmatprep.subr.mxu0 0.0
    %785 = vmatpush1.msra.mxu0 0.0
    %786 = vmatprep.subr.mxu0 0.0
    %787 = vmatpush1.msra.mxu0 0.0
    %788 = vmatprep.subr.mxu0 0.0
    %789 = vmatpush1.msra.mxu0 0.0
    %790 = vmatprep.subr.mxu0 0.0
    %791 = vmatpush1.msra.mxu0 0.0
    %792 = vmatprep.subr.mxu0 0.0
    %793 = vmatpush1.msra.mxu0 0.0
    %794 = vmatprep.subr.mxu0 0.0
    %795 = vmatpush1.msra.mxu0 0.0
    %796 = vmatprep.mubr.f32.mxu0 0.0
    %797 = vmatmul.mubr.f32.gmra.mrb[0].mxu0 %v726
    %v798 = vpop.f32.mrb[0].mxu0
    %v799 = vadd.f32 0.0, %v798
    %v800 = vpop.f32.mrb[0].mxu0
    %801 = vdwg.mxu0
    %vm802 = vcmask 523264
    %803 = vst.msk [vmem:[#allocation3] sm:$0xff] %vm802, %v799
    %s804 = scalar_lea.vmem %s0, 8
    %v805 = vld [vmem:[%s804] sm:$0xff]
    %v806 = vmul.f32 %v805, %v37
    %v807 = vadd.f32 %v806, %v50
    %v808 = vmax.f32 %v807, 0.0
    %810 = vrot.lane.b32.xlu0 %v808, 112
    %v811 = vpop.permute.xlu0 %810
    %v813 = vadd.f32 %v808, %v811
    %v815 = vsel %vm59, %v813, 0
    %817 = vmatprep.subr.mxu0 0.0
    %818 = vmatpush1.msra.mxu0 %v24
    %819 = vmatprep.subr.mxu0 0.0
    %820 = vmatpush1.msra.mxu0 %v25
    %821 = vmatprep.subr.mxu0 0.0
    %822 = vmatpush1.msra.mxu0 0.0
    %823 = vmatprep.subr.mxu0 0.0
    %824 = vmatpush1.msra.mxu0 0.0
    %825 = vmatprep.subr.mxu0 0.0
    %826 = vmatpush1.msra.mxu0 0.0
    %827 = vmatprep.subr.mxu0 0.0
    %828 = vmatpush1.msra.mxu0 0.0
    %829 = vmatprep.subr.mxu0 0.0
    %830 = vmatpush1.msra.mxu0 0.0
    %831 = vmatprep.subr.mxu0 0.0
    %832 = vmatpush1.msra.mxu0 0.0
    %833 = vmatprep.subr.mxu0 0.0
    %834 = vmatpush1.msra.mxu0 0.0
    %835 = vmatprep.subr.mxu0 0.0
    %836 = vmatpush1.msra.mxu0 0.0
    %837 = vmatprep.subr.mxu0 0.0
    %838 = vmatpush1.msra.mxu0 0.0
    %839 = vmatprep.subr.mxu0 0.0
    %840 = vmatpush1.msra.mxu0 0.0
    %841 = vmatprep.subr.mxu0 0.0
    %842 = vmatpush1.msra.mxu0 0.0
    %843 = vmatprep.subr.mxu0 0.0
    %844 = vmatpush1.msra.mxu0 0.0
    %845 = vmatprep.subr.mxu0 0.0
    %846 = vmatpush1.msra.mxu0 0.0
    %847 = vmatprep.subr.mxu0 0.0
    %848 = vmatpush1.msra.mxu0 0.0
    %849 = vmatprep.subr.mxu0 0.0
    %850 = vmatpush1.msra.mxu0 0.0
    %851 = vmatprep.subr.mxu0 0.0
    %852 = vmatpush1.msra.mxu0 0.0
    %853 = vmatprep.subr.mxu0 0.0
    %854 = vmatpush1.msra.mxu0 0.0
    %855 = vmatprep.subr.mxu0 0.0
    %856 = vmatpush1.msra.mxu0 0.0
    %857 = vmatprep.subr.mxu0 0.0
    %858 = vmatpush1.msra.mxu0 0.0
    %859 = vmatprep.subr.mxu0 0.0
    %860 = vmatpush1.msra.mxu0 0.0
    %861 = vmatprep.subr.mxu0 0.0
    %862 = vmatpush1.msra.mxu0 0.0
    %863 = vmatprep.subr.mxu0 0.0
    %864 = vmatpush1.msra.mxu0 0.0
    %865 = vmatprep.subr.mxu0 0.0
    %866 = vmatpush1.msra.mxu0 0.0
    %867 = vmatprep.subr.mxu0 0.0
    %868 = vmatpush1.msra.mxu0 0.0
    %869 = vmatprep.subr.mxu0 0.0
    %870 = vmatpush1.msra.mxu0 0.0
    %871 = vmatprep.subr.mxu0 0.0
    %872 = vmatpush1.msra.mxu0 0.0
    %873 = vmatprep.subr.mxu0 0.0
    %874 = vmatpush1.msra.mxu0 0.0
    %875 = vmatprep.subr.mxu0 0.0
    %876 = vmatpush1.msra.mxu0 0.0
    %877 = vmatprep.subr.mxu0 0.0
    %878 = vmatpush1.msra.mxu0 0.0
    %879 = vmatprep.subr.mxu0 0.0
    %880 = vmatpush1.msra.mxu0 0.0
    %881 = vmatprep.mubr.f32.mxu0 0.0
    %882 = vmatmul.mubr.f32.gmra.mrb[0].mxu0 %v815
    %v883 = vpop.f32.mrb[0].mxu0
    %v884 = vadd.f32 0.0, %v883
    %v885 = vpop.f32.mrb[0].mxu0
    %886 = vdwg.mxu0
    %887 = vst.msk [vmem:[#allocation2] sm:$0xf] %vm133, %v884
    %888 = vrot.lane.b32.xlu0 %v813, 96
    %v889 = vpop.permute.xlu0 %888
    %v890 = vsel %vm59, %v889, 0
    %892 = vmatprep.subr.mxu0 0.0
    %893 = vmatpush1.msra.mxu0 %v24
    %894 = vmatprep.subr.mxu0 0.0
    %895 = vmatpush1.msra.mxu0 %v25
    %896 = vmatprep.subr.mxu0 0.0
    %897 = vmatpush1.msra.mxu0 0.0
    %898 = vmatprep.subr.mxu0 0.0
    %899 = vmatpush1.msra.mxu0 0.0
    %900 = vmatprep.subr.mxu0 0.0
    %901 = vmatpush1.msra.mxu0 0.0
    %902 = vmatprep.subr.mxu0 0.0
    %903 = vmatpush1.msra.mxu0 0.0
    %904 = vmatprep.subr.mxu0 0.0
    %905 = vmatpush1.msra.mxu0 0.0
    %906 = vmatprep.subr.mxu0 0.0
    %907 = vmatpush1.msra.mxu0 0.0
    %908 = vmatprep.subr.mxu0 0.0
    %909 = vmatpush1.msra.mxu0 0.0
    %910 = vmatprep.subr.mxu0 0.0
    %911 = vmatpush1.msra.mxu0 0.0
    %912 = vmatprep.subr.mxu0 0.0
    %913 = vmatpush1.msra.mxu0 0.0
    %914 = vmatprep.subr.mxu0 0.0
    %915 = vmatpush1.msra.mxu0 0.0
    %916 = vmatprep.subr.mxu0 0.0
    %917 = vmatpush1.msra.mxu0 0.0
    %918 = vmatprep.subr.mxu0 0.0
    %919 = vmatpush1.msra.mxu0 0.0
    %920 = vmatprep.subr.mxu0 0.0
    %921 = vmatpush1.msra.mxu0 0.0
    %922 = vmatprep.subr.mxu0 0.0
    %923 = vmatpush1.msra.mxu0 0.0
    %924 = vmatprep.subr.mxu0 0.0
    %925 = vmatpush1.msra.mxu0 0.0
    %926 = vmatprep.subr.mxu0 0.0
    %927 = vmatpush1.msra.mxu0 0.0
    %928 = vmatprep.subr.mxu0 0.0
    %929 = vmatpush1.msra.mxu0 0.0
    %930 = vmatprep.subr.mxu0 0.0
    %931 = vmatpush1.msra.mxu0 0.0
    %932 = vmatprep.subr.mxu0 0.0
    %933 = vmatpush1.msra.mxu0 0.0
    %934 = vmatprep.subr.mxu0 0.0
    %935 = vmatpush1.msra.mxu0 0.0
    %936 = vmatprep.subr.mxu0 0.0
    %937 = vmatpush1.msra.mxu0 0.0
    %938 = vmatprep.subr.mxu0 0.0
    %939 = vmatpush1.msra.mxu0 0.0
    %940 = vmatprep.subr.mxu0 0.0
    %941 = vmatpush1.msra.mxu0 0.0
    %942 = vmatprep.subr.mxu0 0.0
    %943 = vmatpush1.msra.mxu0 0.0
    %944 = vmatprep.subr.mxu0 0.0
    %945 = vmatpush1.msra.mxu0 0.0
    %946 = vmatprep.subr.mxu0 0.0
    %947 = vmatpush1.msra.mxu0 0.0
    %948 = vmatprep.subr.mxu0 0.0
    %949 = vmatpush1.msra.mxu0 0.0
    %950 = vmatprep.subr.mxu0 0.0
    %951 = vmatpush1.msra.mxu0 0.0
    %952 = vmatprep.subr.mxu0 0.0
    %953 = vmatpush1.msra.mxu0 0.0
    %954 = vmatprep.subr.mxu0 0.0
    %955 = vmatpush1.msra.mxu0 0.0
    %956 = vmatprep.mubr.f32.mxu0 0.0
    %957 = vmatmul.mubr.f32.gmra.mrb[0].mxu0 %v890
    %v958 = vpop.f32.mrb[0].mxu0
    %v959 = vadd.f32 0.0, %v958
    %v960 = vpop.f32.mrb[0].mxu0
    %961 = vdwg.mxu0
    %963 = vrot.lane.b32.xlu0 %v959, 8
    %v964 = vpop.permute.xlu0 %963
    %966 = vst.msk [vmem:[#allocation2] sm:$0xf] %vm213, %v964
    %967 = vrot.lane.b32.xlu0 %v813, 64
    %v968 = vpop.permute.xlu0 %967
    %v969 = vsel %vm59, %v968, 0
    %971 = vmatprep.subr.mxu0 0.0
    %972 = vmatpush1.msra.mxu0 %v24
    %973 = vmatprep.subr.mxu0 0.0
    %974 = vmatpush1.msra.mxu0 %v25
    %975 = vmatprep.subr.mxu0 0.0
    %976 = vmatpush1.msra.mxu0 0.0
    %977 = vmatprep.subr.mxu0 0.0
    %978 = vmatpush1.msra.mxu0 0.0
    %979 = vmatprep.subr.mxu0 0.0
    %980 = vmatpush1.msra.mxu0 0.0
    %981 = vmatprep.subr.mxu0 0.0
    %982 = vmatpush1.msra.mxu0 0.0
    %983 = vmatprep.subr.mxu0 0.0
    %984 = vmatpush1.msra.mxu0 0.0
    %985 = vmatprep.subr.mxu0 0.0
    %986 = vmatpush1.msra.mxu0 0.0
    %987 = vmatprep.subr.mxu0 0.0
    %988 = vmatpush1.msra.mxu0 0.0
    %989 = vmatprep.subr.mxu0 0.0
    %990 = vmatpush1.msra.mxu0 0.0
    %991 = vmatprep.subr.mxu0 0.0
    %992 = vmatpush1.msra.mxu0 0.0
    %993 = vmatprep.subr.mxu0 0.0
    %994 = vmatpush1.msra.mxu0 0.0
    %995 = vmatprep.subr.mxu0 0.0
    %996 = vmatpush1.msra.mxu0 0.0
    %997 = vmatprep.subr.mxu0 0.0
    %998 = vmatpush1.msra.mxu0 0.0
    %999 = vmatprep.subr.mxu0 0.0
    %1000 = vmatpush1.msra.mxu0 0.0
    %1001 = vmatprep.subr.mxu0 0.0
    %1002 = vmatpush1.msra.mxu0 0.0
    %1003 = vmatprep.subr.mxu0 0.0
    %1004 = vmatpush1.msra.mxu0 0.0
    %1005 = vmatprep.subr.mxu0 0.0
    %1006 = vmatpush1.msra.mxu0 0.0
    %1007 = vmatprep.subr.mxu0 0.0
    %1008 = vmatpush1.msra.mxu0 0.0
    %1009 = vmatprep.subr.mxu0 0.0
    %1010 = vmatpush1.msra.mxu0 0.0
    %1011 = vmatprep.subr.mxu0 0.0
    %1012 = vmatpush1.msra.mxu0 0.0
    %1013 = vmatprep.subr.mxu0 0.0
    %1014 = vmatpush1.msra.mxu0 0.0
    %1015 = vmatprep.subr.mxu0 0.0
    %1016 = vmatpush1.msra.mxu0 0.0
    %1017 = vmatprep.subr.mxu0 0.0
    %1018 = vmatpush1.msra.mxu0 0.0
    %1019 = vmatprep.subr.mxu0 0.0
    %1020 = vmatpush1.msra.mxu0 0.0
    %1021 = vmatprep.subr.mxu0 0.0
    %1022 = vmatpush1.msra.mxu0 0.0
    %1023 = vmatprep.subr.mxu0 0.0
    %1024 = vmatpush1.msra.mxu0 0.0
    %1025 = vmatprep.subr.mxu0 0.0
    %1026 = vmatpush1.msra.mxu0 0.0
    %1027 = vmatprep.subr.mxu0 0.0
    %1028 = vmatpush1.msra.mxu0 0.0
    %1029 = vmatprep.subr.mxu0 0.0
    %1030 = vmatpush1.msra.mxu0 0.0
    %1031 = vmatprep.subr.mxu0 0.0
    %1032 = vmatpush1.msra.mxu0 0.0
    %1033 = vmatprep.subr.mxu0 0.0
    %1034 = vmatpush1.msra.mxu0 0.0
    %1035 = vmatprep.mubr.f32.mxu0 0.0
    %1036 = vmatmul.mubr.f32.gmra.mrb[0].mxu0 %v969
    %v1037 = vpop.f32.mrb[0].mxu0
    %v1038 = vadd.f32 0.0, %v1037
    %v1039 = vpop.f32.mrb[0].mxu0
    %1040 = vdwg.mxu0
    %1042 = vrot.lane.b32.xlu0 %v1038, 16
    %v1043 = vpop.permute.xlu0 %1042
    %1045 = vst.msk [vmem:[#allocation2] sm:$0xf] %vm293, %v1043
    %1046 = vrot.lane.b32.xlu0 %v813, 32
    %v1047 = vpop.permute.xlu0 %1046
    %v1048 = vsel %vm59, %v1047, 0
    %1050 = vmatprep.subr.mxu0 0.0
    %1051 = vmatpush1.msra.mxu0 %v24
    %1052 = vmatprep.subr.mxu0 0.0
    %1053 = vmatpush1.msra.mxu0 %v25
    %1054 = vmatprep.subr.mxu0 0.0
    %1055 = vmatpush1.msra.mxu0 0.0
    %1056 = vmatprep.subr.mxu0 0.0
    %1057 = vmatpush1.msra.mxu0 0.0
    %1058 = vmatprep.subr.mxu0 0.0
    %1059 = vmatpush1.msra.mxu0 0.0
    %1060 = vmatprep.subr.mxu0 0.0
    %1061 = vmatpush1.msra.mxu0 0.0
    %1062 = vmatprep.subr.mxu0 0.0
    %1063 = vmatpush1.msra.mxu0 0.0
    %1064 = vmatprep.subr.mxu0 0.0
    %1065 = vmatpush1.msra.mxu0 0.0
    %1066 = vmatprep.subr.mxu0 0.0
    %1067 = vmatpush1.msra.mxu0 0.0
    %1068 = vmatprep.subr.mxu0 0.0
    %1069 = vmatpush1.msra.mxu0 0.0
    %1070 = vmatprep.subr.mxu0 0.0
    %1071 = vmatpush1.msra.mxu0 0.0
    %1072 = vmatprep.subr.mxu0 0.0
    %1073 = vmatpush1.msra.mxu0 0.0
    %1074 = vmatprep.subr.mxu0 0.0
    %1075 = vmatpush1.msra.mxu0 0.0
    %1076 = vmatprep.subr.mxu0 0.0
    %1077 = vmatpush1.msra.mxu0 0.0
    %1078 = vmatprep.subr.mxu0 0.0
    %1079 = vmatpush1.msra.mxu0 0.0
    %1080 = vmatprep.subr.mxu0 0.0
    %1081 = vmatpush1.msra.mxu0 0.0
    %1082 = vmatprep.subr.mxu0 0.0
    %1083 = vmatpush1.msra.mxu0 0.0
    %1084 = vmatprep.subr.mxu0 0.0
    %1085 = vmatpush1.msra.mxu0 0.0
    %1086 = vmatprep.subr.mxu0 0.0
    %1087 = vmatpush1.msra.mxu0 0.0
    %1088 = vmatprep.subr.mxu0 0.0
    %1089 = vmatpush1.msra.mxu0 0.0
    %1090 = vmatprep.subr.mxu0 0.0
    %1091 = vmatpush1.msra.mxu0 0.0
    %1092 = vmatprep.subr.mxu0 0.0
    %1093 = vmatpush1.msra.mxu0 0.0
    %1094 = vmatprep.subr.mxu0 0.0
    %1095 = vmatpush1.msra.mxu0 0.0
    %1096 = vmatprep.subr.mxu0 0.0
    %1097 = vmatpush1.msra.mxu0 0.0
    %1098 = vmatprep.subr.mxu0 0.0
    %1099 = vmatpush1.msra.mxu0 0.0
    %1100 = vmatprep.subr.mxu0 0.0
    %1101 = vmatpush1.msra.mxu0 0.0
    %1102 = vmatprep.subr.mxu0 0.0
    %1103 = vmatpush1.msra.mxu0 0.0
    %1104 = vmatprep.subr.mxu0 0.0
    %1105 = vmatpush1.msra.mxu0 0.0
    %1106 = vmatprep.subr.mxu0 0.0
    %1107 = vmatpush1.msra.mxu0 0.0
    %1108 = vmatprep.subr.mxu0 0.0
    %1109 = vmatpush1.msra.mxu0 0.0
    %1110 = vmatprep.subr.mxu0 0.0
    %1111 = vmatpush1.msra.mxu0 0.0
    %1112 = vmatprep.subr.mxu0 0.0
    %1113 = vmatpush1.msra.mxu0 0.0
    %1114 = vmatprep.mubr.f32.mxu0 0.0
    %1115 = vmatmul.mubr.f32.gmra.mrb[0].mxu0 %v1048
    %v1116 = vpop.f32.mrb[0].mxu0
    %v1117 = vadd.f32 0.0, %v1116
    %v1118 = vpop.f32.mrb[0].mxu0
    %1119 = vdwg.mxu0
    %1121 = vrot.lane.b32.xlu0 %v1117, 24
    %v1122 = vpop.permute.xlu0 %1121
    %1124 = vst.msk [vmem:[#allocation2] sm:$0xf] %vm373, %v1122
    %v1125 = vrot.slane %v808, 4
    %v1127 = vrot.slane %v811, 4
    %v1129 = vadd.f32 %v1125, %v1127
    %v1131 = vsel %vm59, %v1129, 0
    %1133 = vmatprep.subr.mxu0 0.0
    %1134 = vmatpush1.msra.mxu0 %v24
    %1135 = vmatprep.subr.mxu0 0.0
    %1136 = vmatpush1.msra.mxu0 %v25
    %1137 = vmatprep.subr.mxu0 0.0
    %1138 = vmatpush1.msra.mxu0 0.0
    %1139 = vmatprep.subr.mxu0 0.0
    %1140 = vmatpush1.msra.mxu0 0.0
    %1141 = vmatprep.subr.mxu0 0.0
    %1142 = vmatpush1.msra.mxu0 0.0
    %1143 = vmatprep.subr.mxu0 0.0
    %1144 = vmatpush1.msra.mxu0 0.0
    %1145 = vmatprep.subr.mxu0 0.0
    %1146 = vmatpush1.msra.mxu0 0.0
    %1147 = vmatprep.subr.mxu0 0.0
    %1148 = vmatpush1.msra.mxu0 0.0
    %1149 = vmatprep.subr.mxu0 0.0
    %1150 = vmatpush1.msra.mxu0 0.0
    %1151 = vmatprep.subr.mxu0 0.0
    %1152 = vmatpush1.msra.mxu0 0.0
    %1153 = vmatprep.subr.mxu0 0.0
    %1154 = vmatpush1.msra.mxu0 0.0
    %1155 = vmatprep.subr.mxu0 0.0
    %1156 = vmatpush1.msra.mxu0 0.0
    %1157 = vmatprep.subr.mxu0 0.0
    %1158 = vmatpush1.msra.mxu0 0.0
    %1159 = vmatprep.subr.mxu0 0.0
    %1160 = vmatpush1.msra.mxu0 0.0
    %1161 = vmatprep.subr.mxu0 0.0
    %1162 = vmatpush1.msra.mxu0 0.0
    %1163 = vmatprep.subr.mxu0 0.0
    %1164 = vmatpush1.msra.mxu0 0.0
    %1165 = vmatprep.subr.mxu0 0.0
    %1166 = vmatpush1.msra.mxu0 0.0
    %1167 = vmatprep.subr.mxu0 0.0
    %1168 = vmatpush1.msra.mxu0 0.0
    %1169 = vmatprep.subr.mxu0 0.0
    %1170 = vmatpush1.msra.mxu0 0.0
    %1171 = vmatprep.subr.mxu0 0.0
    %1172 = vmatpush1.msra.mxu0 0.0
    %1173 = vmatprep.subr.mxu0 0.0
    %1174 = vmatpush1.msra.mxu0 0.0
    %1175 = vmatprep.subr.mxu0 0.0
    %1176 = vmatpush1.msra.mxu0 0.0
    %1177 = vmatprep.subr.mxu0 0.0
    %1178 = vmatpush1.msra.mxu0 0.0
    %1179 = vmatprep.subr.mxu0 0.0
    %1180 = vmatpush1.msra.mxu0 0.0
    %1181 = vmatprep.subr.mxu0 0.0
    %1182 = vmatpush1.msra.mxu0 0.0
    %1183 = vmatprep.subr.mxu0 0.0
    %1184 = vmatpush1.msra.mxu0 0.0
    %1185 = vmatprep.subr.mxu0 0.0
    %1186 = vmatpush1.msra.mxu0 0.0
    %1187 = vmatprep.subr.mxu0 0.0
    %1188 = vmatpush1.msra.mxu0 0.0
    %1189 = vmatprep.subr.mxu0 0.0
    %1190 = vmatpush1.msra.mxu0 0.0
    %1191 = vmatprep.subr.mxu0 0.0
    %1192 = vmatpush1.msra.mxu0 0.0
    %1193 = vmatprep.subr.mxu0 0.0
    %1194 = vmatpush1.msra.mxu0 0.0
    %1195 = vmatprep.subr.mxu0 0.0
    %1196 = vmatpush1.msra.mxu0 0.0
    %1197 = vmatprep.mubr.f32.mxu0 0.0
    %1198 = vmatmul.mubr.f32.gmra.mrb[0].mxu0 %v1131
    %v1199 = vpop.f32.mrb[0].mxu0
    %v1200 = vadd.f32 0.0, %v1199
    %v1201 = vpop.f32.mrb[0].mxu0
    %1202 = vdwg.mxu0
    %1204 = vrot.lane.b32.xlu0 %v1200, 32
    %v1205 = vpop.permute.xlu0 %1204
    %1207 = vst.msk [vmem:[#allocation2] sm:$0xf] %vm457, %v1205
    %1208 = vrot.lane.b32.xlu0 %v808, 96
    %v1209 = vpop.permute.xlu0 %1208
    %v1210 = vrot.slane %v1209, 4
    %1212 = vrot.lane.b32.xlu0 %v808, 80
    %v1213 = vpop.permute.xlu0 %1212
    %v1214 = vrot.slane %v1213, 4
    %v1216 = vadd.f32 %v1210, %v1214
    %v1218 = vsel %vm59, %v1216, 0
    %1220 = vmatprep.subr.mxu0 0.0
    %1221 = vmatpush1.msra.mxu0 %v24
    %1222 = vmatprep.subr.mxu0 0.0
    %1223 = vmatpush1.msra.mxu0 %v25
    %1224 = vmatprep.subr.mxu0 0.0
    %1225 = vmatpush1.msra.mxu0 0.0
    %1226 = vmatprep.subr.mxu0 0.0
    %1227 = vmatpush1.msra.mxu0 0.0
    %1228 = vmatprep.subr.mxu0 0.0
    %1229 = vmatpush1.msra.mxu0 0.0
    %1230 = vmatprep.subr.mxu0 0.0
    %1231 = vmatpush1.msra.mxu0 0.0
    %1232 = vmatprep.subr.mxu0 0.0
    %1233 = vmatpush1.msra.mxu0 0.0
    %1234 = vmatprep.subr.mxu0 0.0
    %1235 = vmatpush1.msra.mxu0 0.0
    %1236 = vmatprep.subr.mxu0 0.0
    %1237 = vmatpush1.msra.mxu0 0.0
    %1238 = vmatprep.subr.mxu0 0.0
    %1239 = vmatpush1.msra.mxu0 0.0
    %1240 = vmatprep.subr.mxu0 0.0
    %1241 = vmatpush1.msra.mxu0 0.0
    %1242 = vmatprep.subr.mxu0 0.0
    %1243 = vmatpush1.msra.mxu0 0.0
    %1244 = vmatprep.subr.mxu0 0.0
    %1245 = vmatpush1.msra.mxu0 0.0
    %1246 = vmatprep.subr.mxu0 0.0
    %1247 = vmatpush1.msra.mxu0 0.0
    %1248 = vmatprep.subr.mxu0 0.0
    %1249 = vmatpush1.msra.mxu0 0.0
    %1250 = vmatprep.subr.mxu0 0.0
    %1251 = vmatpush1.msra.mxu0 0.0
    %1252 = vmatprep.subr.mxu0 0.0
    %1253 = vmatpush1.msra.mxu0 0.0
    %1254 = vmatprep.subr.mxu0 0.0
    %1255 = vmatpush1.msra.mxu0 0.0
    %1256 = vmatprep.subr.mxu0 0.0
    %1257 = vmatpush1.msra.mxu0 0.0
    %1258 = vmatprep.subr.mxu0 0.0
    %1259 = vmatpush1.msra.mxu0 0.0
    %1260 = vmatprep.subr.mxu0 0.0
    %1261 = vmatpush1.msra.mxu0 0.0
    %1262 = vmatprep.subr.mxu0 0.0
    %1263 = vmatpush1.msra.mxu0 0.0
    %1264 = vmatprep.subr.mxu0 0.0
    %1265 = vmatpush1.msra.mxu0 0.0
    %1266 = vmatprep.subr.mxu0 0.0
    %1267 = vmatpush1.msra.mxu0 0.0
    %1268 = vmatprep.subr.mxu0 0.0
    %1269 = vmatpush1.msra.mxu0 0.0
    %1270 = vmatprep.subr.mxu0 0.0
    %1271 = vmatpush1.msra.mxu0 0.0
    %1272 = vmatprep.subr.mxu0 0.0
    %1273 = vmatpush1.msra.mxu0 0.0
    %1274 = vmatprep.subr.mxu0 0.0
    %1275 = vmatpush1.msra.mxu0 0.0
    %1276 = vmatprep.subr.mxu0 0.0
    %1277 = vmatpush1.msra.mxu0 0.0
    %1278 = vmatprep.subr.mxu0 0.0
    %1279 = vmatpush1.msra.mxu0 0.0
    %1280 = vmatprep.subr.mxu0 0.0
    %1281 = vmatpush1.msra.mxu0 0.0
    %1282 = vmatprep.subr.mxu0 0.0
    %1283 = vmatpush1.msra.mxu0 0.0
    %1284 = vmatprep.mubr.f32.mxu0 0.0
    %1285 = vmatmul.mubr.f32.gmra.mrb[0].mxu0 %v1218
    %v1286 = vpop.f32.mrb[0].mxu0
    %v1287 = vadd.f32 0.0, %v1286
    %v1288 = vpop.f32.mrb[0].mxu0
    %1289 = vdwg.mxu0
    %1291 = vrot.lane.b32.xlu0 %v1287, 40
    %v1292 = vpop.permute.xlu0 %1291
    %1294 = vst.msk [vmem:[#allocation2] sm:$0xf] %vm545, %v1292
    %1295 = vrot.lane.b32.xlu0 %v808, 64
    %v1296 = vpop.permute.xlu0 %1295
    %v1297 = vrot.slane %v1296, 4
    %1299 = vrot.lane.b32.xlu0 %v808, 48
    %v1300 = vpop.permute.xlu0 %1299
    %v1301 = vrot.slane %v1300, 4
    %v1303 = vadd.f32 %v1297, %v1301
    %v1305 = vsel %vm59, %v1303, 0
    %1307 = vmatprep.subr.mxu0 0.0
    %1308 = vmatpush1.msra.mxu0 %v24
    %1309 = vmatprep.subr.mxu0 0.0
    %1310 = vmatpush1.msra.mxu0 %v25
    %1311 = vmatprep.subr.mxu0 0.0
    %1312 = vmatpush1.msra.mxu0 0.0
    %1313 = vmatprep.subr.mxu0 0.0
    %1314 = vmatpush1.msra.mxu0 0.0
    %1315 = vmatprep.subr.mxu0 0.0
    %1316 = vmatpush1.msra.mxu0 0.0
    %1317 = vmatprep.subr.mxu0 0.0
    %1318 = vmatpush1.msra.mxu0 0.0
    %1319 = vmatprep.subr.mxu0 0.0
    %1320 = vmatpush1.msra.mxu0 0.0
    %1321 = vmatprep.subr.mxu0 0.0
    %1322 = vmatpush1.msra.mxu0 0.0
    %1323 = vmatprep.subr.mxu0 0.0
    %1324 = vmatpush1.msra.mxu0 0.0
    %1325 = vmatprep.subr.mxu0 0.0
    %1326 = vmatpush1.msra.mxu0 0.0
    %1327 = vmatprep.subr.mxu0 0.0
    %1328 = vmatpush1.msra.mxu0 0.0
    %1329 = vmatprep.subr.mxu0 0.0
    %1330 = vmatpush1.msra.mxu0 0.0
    %1331 = vmatprep.subr.mxu0 0.0
    %1332 = vmatpush1.msra.mxu0 0.0
    %1333 = vmatprep.subr.mxu0 0.0
    %1334 = vmatpush1.msra.mxu0 0.0
    %1335 = vmatprep.subr.mxu0 0.0
    %1336 = vmatpush1.msra.mxu0 0.0
    %1337 = vmatprep.subr.mxu0 0.0
    %1338 = vmatpush1.msra.mxu0 0.0
    %1339 = vmatprep.subr.mxu0 0.0
    %1340 = vmatpush1.msra.mxu0 0.0
    %1341 = vmatprep.subr.mxu0 0.0
    %1342 = vmatpush1.msra.mxu0 0.0
    %1343 = vmatprep.subr.mxu0 0.0
    %1344 = vmatpush1.msra.mxu0 0.0
    %1345 = vmatprep.subr.mxu0 0.0
    %1346 = vmatpush1.msra.mxu0 0.0
    %1347 = vmatprep.subr.mxu0 0.0
    %1348 = vmatpush1.msra.mxu0 0.0
    %1349 = vmatprep.subr.mxu0 0.0
    %1350 = vmatpush1.msra.mxu0 0.0
    %1351 = vmatprep.subr.mxu0 0.0
    %1352 = vmatpush1.msra.mxu0 0.0
    %1353 = vmatprep.subr.mxu0 0.0
    %1354 = vmatpush1.msra.mxu0 0.0
    %1355 = vmatprep.subr.mxu0 0.0
    %1356 = vmatpush1.msra.mxu0 0.0
    %1357 = vmatprep.subr.mxu0 0.0
    %1358 = vmatpush1.msra.mxu0 0.0
    %1359 = vmatprep.subr.mxu0 0.0
    %1360 = vmatpush1.msra.mxu0 0.0
    %1361 = vmatprep.subr.mxu0 0.0
    %1362 = vmatpush1.msra.mxu0 0.0
    %1363 = vmatprep.subr.mxu0 0.0
    %1364 = vmatpush1.msra.mxu0 0.0
    %1365 = vmatprep.subr.mxu0 0.0
    %1366 = vmatpush1.msra.mxu0 0.0
    %1367 = vmatprep.subr.mxu0 0.0
    %1368 = vmatpush1.msra.mxu0 0.0
    %1369 = vmatprep.subr.mxu0 0.0
    %1370 = vmatpush1.msra.mxu0 0.0
    %1371 = vmatprep.mubr.f32.mxu0 0.0
    %1372 = vmatmul.mubr.f32.gmra.mrb[0].mxu0 %v1305
    %v1373 = vpop.f32.mrb[0].mxu0
    %v1374 = vadd.f32 0.0, %v1373
    %v1375 = vpop.f32.mrb[0].mxu0
    %1376 = vdwg.mxu0
    %1378 = vrot.lane.b32.xlu0 %v1374, 48
    %v1379 = vpop.permute.xlu0 %1378
    %1381 = vst.msk [vmem:[#allocation2] sm:$0xf] %vm633, %v1379
    %1382 = vrot.lane.b32.xlu0 %v808, 32
    %v1383 = vpop.permute.xlu0 %1382
    %v1384 = vrot.slane %v1383, 4
    %1386 = vrot.lane.b32.xlu0 %v808, 16
    %v1387 = vpop.permute.xlu0 %1386
    %v1388 = vrot.slane %v1387, 4
    %v1390 = vadd.f32 %v1384, %v1388
    %v1392 = vsel %vm59, %v1390, 0
    %1394 = vmatprep.subr.mxu0 0.0
    %1395 = vmatpush1.msra.mxu0 %v24
    %1396 = vmatprep.subr.mxu0 0.0
    %1397 = vmatpush1.msra.mxu0 %v25
    %1398 = vmatprep.subr.mxu0 0.0
    %1399 = vmatpush1.msra.mxu0 0.0
    %1400 = vmatprep.subr.mxu0 0.0
    %1401 = vmatpush1.msra.mxu0 0.0
    %1402 = vmatprep.subr.mxu0 0.0
    %1403 = vmatpush1.msra.mxu0 0.0
    %1404 = vmatprep.subr.mxu0 0.0
    %1405 = vmatpush1.msra.mxu0 0.0
    %1406 = vmatprep.subr.mxu0 0.0
    %1407 = vmatpush1.msra.mxu0 0.0
    %1408 = vmatprep.subr.mxu0 0.0
    %1409 = vmatpush1.msra.mxu0 0.0
    %1410 = vmatprep.subr.mxu0 0.0
    %1411 = vmatpush1.msra.mxu0 0.0
    %1412 = vmatprep.subr.mxu0 0.0
    %1413 = vmatpush1.msra.mxu0 0.0
    %1414 = vmatprep.subr.mxu0 0.0
    %1415 = vmatpush1.msra.mxu0 0.0
    %1416 = vmatprep.subr.mxu0 0.0
    %1417 = vmatpush1.msra.mxu0 0.0
    %1418 = vmatprep.subr.mxu0 0.0
    %1419 = vmatpush1.msra.mxu0 0.0
    %1420 = vmatprep.subr.mxu0 0.0
    %1421 = vmatpush1.msra.mxu0 0.0
    %1422 = vmatprep.subr.mxu0 0.0
    %1423 = vmatpush1.msra.mxu0 0.0
    %1424 = vmatprep.subr.mxu0 0.0
    %1425 = vmatpush1.msra.mxu0 0.0
    %1426 = vmatprep.subr.mxu0 0.0
    %1427 = vmatpush1.msra.mxu0 0.0
    %1428 = vmatprep.subr.mxu0 0.0
    %1429 = vmatpush1.msra.mxu0 0.0
    %1430 = vmatprep.subr.mxu0 0.0
    %1431 = vmatpush1.msra.mxu0 0.0
    %1432 = vmatprep.subr.mxu0 0.0
    %1433 = vmatpush1.msra.mxu0 0.0
    %1434 = vmatprep.subr.mxu0 0.0
    %1435 = vmatpush1.msra.mxu0 0.0
    %1436 = vmatprep.subr.mxu0 0.0
    %1437 = vmatpush1.msra.mxu0 0.0
    %1438 = vmatprep.subr.mxu0 0.0
    %1439 = vmatpush1.msra.mxu0 0.0
    %1440 = vmatprep.subr.mxu0 0.0
    %1441 = vmatpush1.msra.mxu0 0.0
    %1442 = vmatprep.subr.mxu0 0.0
    %1443 = vmatpush1.msra.mxu0 0.0
    %1444 = vmatprep.subr.mxu0 0.0
    %1445 = vmatpush1.msra.mxu0 0.0
    %1446 = vmatprep.subr.mxu0 0.0
    %1447 = vmatpush1.msra.mxu0 0.0
    %1448 = vmatprep.subr.mxu0 0.0
    %1449 = vmatpush1.msra.mxu0 0.0
    %1450 = vmatprep.subr.mxu0 0.0
    %1451 = vmatpush1.msra.mxu0 0.0
    %1452 = vmatprep.subr.mxu0 0.0
    %1453 = vmatpush1.msra.mxu0 0.0
    %1454 = vmatprep.subr.mxu0 0.0
    %1455 = vmatpush1.msra.mxu0 0.0
    %1456 = vmatprep.subr.mxu0 0.0
    %1457 = vmatpush1.msra.mxu0 0.0
    %1458 = vmatprep.mubr.f32.mxu0 0.0
    %1459 = vmatmul.mubr.f32.gmra.mrb[0].mxu0 %v1392
    %v1460 = vpop.f32.mrb[0].mxu0
    %v1461 = vadd.f32 0.0, %v1460
    %v1462 = vpop.f32.mrb[0].mxu0
    %1463 = vdwg.mxu0
    %1465 = vrot.lane.b32.xlu0 %v1461, 56
    %v1466 = vpop.permute.xlu0 %1465
    %1468 = vst.msk [vmem:[#allocation2] sm:$0xf] %vm721, %v1466
    %v1469 = vld [vmem:[#allocation2] sm:$0xf]
    %v1471 = vsel %vm728, %v1469, 0
    %1473 = vmatprep.subr.mxu0 0.0
    %1474 = vmatpush1.msra.mxu0 %v1471
    %1475 = vmatprep.subr.mxu0 0.0
    %1476 = vmatpush1.msra.mxu0 0.0
    %1477 = vmatprep.subr.mxu0 0.0
    %1478 = vmatpush1.msra.mxu0 0.0
    %1479 = vmatprep.subr.mxu0 0.0
    %1480 = vmatpush1.msra.mxu0 0.0
    %1481 = vmatprep.subr.mxu0 0.0
    %1482 = vmatpush1.msra.mxu0 0.0
    %1483 = vmatprep.subr.mxu0 0.0
    %1484 = vmatpush1.msra.mxu0 0.0
    %1485 = vmatprep.subr.mxu0 0.0
    %1486 = vmatpush1.msra.mxu0 0.0
    %1487 = vmatprep.subr.mxu0 0.0
    %1488 = vmatpush1.msra.mxu0 0.0
    %1489 = vmatprep.subr.mxu0 0.0
    %1490 = vmatpush1.msra.mxu0 0.0
    %1491 = vmatprep.subr.mxu0 0.0
    %1492 = vmatpush1.msra.mxu0 0.0
    %1493 = vmatprep.subr.mxu0 0.0
    %1494 = vmatpush1.msra.mxu0 0.0
    %1495 = vmatprep.subr.mxu0 0.0
    %1496 = vmatpush1.msra.mxu0 0.0
    %1497 = vmatprep.subr.mxu0 0.0
    %1498 = vmatpush1.msra.mxu0 0.0
    %1499 = vmatprep.subr.mxu0 0.0
    %1500 = vmatpush1.msra.mxu0 0.0
    %1501 = vmatprep.subr.mxu0 0.0
    %1502 = vmatpush1.msra.mxu0 0.0
    %1503 = vmatprep.subr.mxu0 0.0
    %1504 = vmatpush1.msra.mxu0 0.0
    %1505 = vmatprep.subr.mxu0 0.0
    %1506 = vmatpush1.msra.mxu0 0.0
    %1507 = vmatprep.subr.mxu0 0.0
    %1508 = vmatpush1.msra.mxu0 0.0
    %1509 = vmatprep.subr.mxu0 0.0
    %1510 = vmatpush1.msra.mxu0 0.0
    %1511 = vmatprep.subr.mxu0 0.0
    %1512 = vmatpush1.msra.mxu0 0.0
    %1513 = vmatprep.subr.mxu0 0.0
    %1514 = vmatpush1.msra.mxu0 0.0
    %1515 = vmatprep.subr.mxu0 0.0
    %1516 = vmatpush1.msra.mxu0 0.0
    %1517 = vmatprep.subr.mxu0 0.0
    %1518 = vmatpush1.msra.mxu0 0.0
    %1519 = vmatprep.subr.mxu0 0.0
    %1520 = vmatpush1.msra.mxu0 0.0
    %1521 = vmatprep.subr.mxu0 0.0
    %1522 = vmatpush1.msra.mxu0 0.0
    %1523 = vmatprep.subr.mxu0 0.0
    %1524 = vmatpush1.msra.mxu0 0.0
    %1525 = vmatprep.subr.mxu0 0.0
    %1526 = vmatpush1.msra.mxu0 0.0
    %1527 = vmatprep.subr.mxu0 0.0
    %1528 = vmatpush1.msra.mxu0 0.0
    %1529 = vmatprep.subr.mxu0 0.0
    %1530 = vmatpush1.msra.mxu0 0.0
    %1531 = vmatprep.subr.mxu0 0.0
    %1532 = vmatpush1.msra.mxu0 0.0
    %1533 = vmatprep.subr.mxu0 0.0
    %1534 = vmatpush1.msra.mxu0 0.0
    %1535 = vmatprep.subr.mxu0 0.0
    %1536 = vmatpush1.msra.mxu0 0.0
    %1537 = vmatprep.mubr.f32.mxu0 0.0
    %1538 = vmatmul.mubr.f32.gmra.mrb[0].mxu0 %v726
    %v1539 = vpop.f32.mrb[0].mxu0
    %v1540 = vadd.f32 0.0, %v1539
    %v1541 = vpop.f32.mrb[0].mxu0
    %1542 = vdwg.mxu0
    %s1543 = scalar_lea.vmem [#allocation3], 8
    %1544 = vst.msk [vmem:[%s1543] sm:$0xff] %vm802, %v1540
    // Predicated region
    $region22: #{tpu_custom_call.1} parent=1 // pred_check
      _
    $region23: #{tpu_custom_call.1} parent=1 // pred_check_branch
      %1546 = sbr.rel (0) target = $region25
    $region24: #{tpu_custom_call.1} parent=1 // pred_region
      %s1548 = ssub.s32 256, 256
      %1549 = vsyncadd [#allocation4], %s1548
      %s1550 = sshll.u32 [#allocation3], 4
      %s1551 = int_to_ptr.vmem [resolvable:$true] %s1550
      %1556 = dma.vmem_to_hbm [thread:$0]  %s1551, 256, %s5, [#allocation4], 128, 128, 8
    $region25: #{tpu_custom_call.1} parent=1 // pred_fallthru
      _
    // Predicated region
    $region26: #{tpu_custom_call.1} parent=1 // pred_check
      _
    $region27: #{tpu_custom_call.1} parent=1 // pred_check_branch
      %1558 = sbr.rel (0) target = $region29
    $region28: #{tpu_custom_call.1} parent=1 // pred_region
      %1559 = dma.done [#allocation4], 256
    $region29: #{tpu_custom_call.1} parent=1 // pred_fallthru
      _
    %1560 = vsyncpa [#allocation4], 1

</llo_original>
